<compile_context>
chip_gen: v7x
topology: tpu7x:2x2x1
jax: 0.10.0
libtpu: 0.0.40
codegen_flags: <defaults>
</compile_context>

<pallas_src>
import functools

import numpy as np
import jax
import jax.numpy as jnp
from jax import lax
from jax.experimental import pallas as pl
from jax.experimental.pallas import tpu as pltpu

EPS = 1e-5
# Conservative single-call VMEM budget: fits v7x's 64 MiB/TC with headroom and
# is far under the 128 MiB of v5e/v6e.
_VMEM_BUDGET = 40 * 1024 * 1024


def _conv3x3_masks(H, W, N):
    """(9, N*H*W) f32 validity masks for the 9 taps of a pad-1 3x3 conv.

    Built once in the wrapper (hoisted).  Position q = n*H*W + h*W + w is 1 for
    tap (dh, dw) iff (h+dh, w+dw) lies inside image n; everything a lane roll
    would fetch from the wrong row / the neighbouring image / the wrap-around
    is zeroed.
    """
    hh = jnp.arange(H).reshape(H, 1)
    ww = jnp.arange(W).reshape(1, W)
    rows = []
    for dh in (-1, 0, 1):
        for dw in (-1, 0, 1):
            valid = ((hh + dh >= 0) & (hh + dh < H) &
                     (ww + dw >= 0) & (ww + dw < W))
            rows.append(valid.reshape(1, H * W))
    m = jnp.concatenate(rows, axis=0).astype(jnp.float32)      # (9, H*W)
    return jnp.tile(m, (1, N))                                 # (9, N*H*W)


def _conv3x3(a_f32, w_ref, mask_ref, img_w, compute_dtype, accumulate):
    """3x3 / pad-1 / stride-1 conv of lane-dense activations.

    a_f32:    (C, L) f32, L = N*H*W flattened on the lane axis.
    w_ref:    (Cout, 9*C) ref in compute_dtype, columns ordered (kh, kw, ci).
    mask_ref: (9, L) f32 tap-validity masks.
    Returns   (Cout, L) f32 (MXU accumulation stays f32).
    """
    C, L = a_f32.shape
    if not accumulate:
        # Small C: one im2col matmul so K = 9*C fills the MXU contraction dim.
        taps = []
        k = 0
        for dh in (-1, 0, 1):
            for dw in (-1, 0, 1):
                d = dh * img_w + dw
                if d == 0:
                    taps.append(a_f32)          # center tap: mask is all ones
                else:
                    shifted = pltpu.roll(a_f32, shift=(-d) % L, axis=1)
                    taps.append(shifted * mask_ref[k:k + 1, :])
                k += 1
        patches = jnp.concatenate(taps, axis=0)                 # (9*C, L)
        return jnp.dot(w_ref[...], patches.astype(compute_dtype),
                       preferred_element_type=jnp.float32)
    # Large C (>= 128): nine accumulating K=C matmuls; avoids the 9x im2col
    # VMEM blow-up and the concatenate copy (store-slot pressure on v5e).
    acc = jnp.zeros((w_ref.shape[0], L), jnp.float32)
    k = 0
    for dh in (-1, 0, 1):
        for dw in (-1, 0, 1):
            d = dh * img_w + dw
            if d == 0:
                tap = a_f32
            else:
                tap = pltpu.roll(a_f32, shift=(-d) % L, axis=1) * mask_ref[k:k + 1, :]
            acc = acc + jnp.dot(w_ref[:, k * C:(k + 1) * C],
                                tap.astype(compute_dtype),
                                preferred_element_type=jnp.float32)
            k += 1
    return acc


def _fused_basicblock_kernel(x_ref, w1_ref, w2_ref, mask_ref,
                             g1_ref, b1_ref, g2_ref, b2_ref, out_ref,
                             *, n_img, img_s, img_w, compute_dtype, accumulate):
    """conv1 -> BN1(batch stats) -> ReLU -> conv2 -> BN2 -> +identity -> ReLU."""
    inv_count = 1.0 / float(n_img * img_s)

    # Assemble the whole batch lane-dense: (C, L = N*S).  In-kernel concat of
    # the per-image tiles (VMEM copies only; no extra HBM pass or transpose).
    xs = jnp.concatenate([x_ref[n] for n in range(n_img)], axis=1)
    xf = xs.astype(jnp.float32)

    def bn(h, g, b):
        # Training-mode batch statistics, centered (two-pass) variance.
        mean = jnp.sum(h, axis=1, keepdims=True) * inv_count
        c = h - mean
        var = jnp.sum(c * c, axis=1, keepdims=True) * inv_count
        return c * (g * lax.rsqrt(var + EPS)) + b

    # conv1 + BN1 + ReLU (all elementwise math in f32).
    h1 = _conv3x3(xf, w1_ref, mask_ref, img_w, compute_dtype, accumulate)
    a1 = jnp.maximum(bn(h1, g1_ref[...], b1_ref[...]), 0.0)

    # conv2 + BN2 + identity residual + ReLU.
    h2 = _conv3x3(a1, w2_ref, mask_ref, img_w, compute_dtype, accumulate)
    y = jnp.maximum(bn(h2, g2_ref[...], b2_ref[...]) + xf, 0.0)

    # Scatter back to the (N, Cout, S) output layout (lane-aligned slices).
    for n in range(n_img):
        out_ref[n] = y[:, n * img_s:(n + 1) * img_s].astype(out_ref.dtype)


def _fused_vmem_bytes(N, C, S, x_bytes, out_bytes, cd_bytes):
    """Rough (conservative) live-VMEM estimate for the fused kernel."""
    L = N * S
    act = C * L
    est = (act * x_bytes + act * out_bytes       # x / out blocks
           + 9 * L * 4                           # tap masks
           + 18 * C * C * cd_bytes               # w1 + w2
           + 9 * act * (4 + cd_bytes)            # im2col patches (f32 + MXU dtype)
           + 6 * act * 4)                        # xs/h1/a1/h2/y f32 temporaries
    return 2 * est                               # double-buffer / compiler slack


def basicblock_forward(x_nchw, params, stride=1, compute_dtype=jnp.bfloat16):
    """Training-mode forward of the PyTorch BasicBlock (downsample=None)."""
    assert stride == 1, "identity residual (downsample=None) requires stride == 1"
    N, Cin, H, W = x_nchw.shape
    Cout = params["w1"].shape[0]
    assert Cin == Cout, "identity residual requires in_dimensions == out_dimensions"
    S = H * W
    L = N * S

    footprint = _fused_vmem_bytes(N, Cout, S, x_nchw.dtype.itemsize,
                                  x_nchw.dtype.itemsize,
                                  jnp.dtype(compute_dtype).itemsize)
    assert footprint <= _VMEM_BUDGET, (
        f"fused BasicBlock footprint {footprint} B exceeds the VMEM budget; "
        "tiled fallback not implemented")

    # Free reshape only; keep the caller's dtype (no wrapper upcast/transpose).
    x = x_nchw.reshape(N, Cin, S)
    # OIHW -> (Cout, 9*Cin) with columns ordered (kh, kw, ci); pre-cast once to
    # the MXU operand dtype so no per-step casts run inside the kernel.
    w1 = jnp.transpose(params["w1"], (0, 2, 3, 1)).reshape(Cout, 9 * Cin)
    w2 = jnp.transpose(params["w2"], (0, 2, 3, 1)).reshape(Cout, 9 * Cout)
    w1 = w1.astype(compute_dtype)
    w2 = w2.astype(compute_dtype)
    # Masks stay f32: the tap masking runs on the VPU in f32 (v5e has no bf16
    # VPU); operands are cast to compute_dtype only at the MXU dot.
    mask = _conv3x3_masks(H, W, N)                              # (9, L)
    g1 = params["g1"].reshape(Cout, 1).astype(jnp.float32)
    b1 = params["b1"].reshape(Cout, 1).astype(jnp.float32)
    g2 = params["g2"].reshape(Cout, 1).astype(jnp.float32)
    b2 = params["b2"].reshape(Cout, 1).astype(jnp.float32)

    accumulate = Cout >= 128
    kernel = functools.partial(
        _fused_basicblock_kernel, n_img=N, img_s=S, img_w=W,
        compute_dtype=compute_dtype, accumulate=accumulate)

    def full_spec(shape):
        nd = len(shape)
        return pl.BlockSpec(shape, lambda i, _nd=nd: (0,) * _nd)

    vmem_limit = int(min(56 * 1024 * 1024,
                         max(32 * 1024 * 1024, 2 * footprint)))

    out = pl.pallas_call(
        kernel,
        grid=(1,),
        in_specs=[
            full_spec((N, Cin, S)),
            full_spec((Cout, 9 * Cin)),
            full_spec((Cout, 9 * Cout)),
            full_spec((9, L)),
            full_spec((Cout, 1)),
            full_spec((Cout, 1)),
            full_spec((Cout, 1)),
            full_spec((Cout, 1)),
        ],
        out_specs=full_spec((N, Cout, S)),
        out_shape=jax.ShapeDtypeStruct((N, Cout, S), x_nchw.dtype),
        compiler_params=pltpu.CompilerParams(
            dimension_semantics=("arbitrary",),
            vmem_limit_bytes=vmem_limit),
    )(x, w1, w2, mask, g1, b1, g2, b2)

    return out.reshape(N, Cout, H, W)


def basicblock_reference(x, p, compute_dtype=jnp.float32):
    """Pure-JAX reference with identical semantics (same matmul operand dtype)."""
    def conv(a, w):
        return lax.conv_general_dilated(
            a.astype(compute_dtype), w.astype(compute_dtype), (1, 1),
            ((1, 1), (1, 1)), dimension_numbers=("NCHW", "OIHW", "NCHW"),
            preferred_element_type=jnp.float32)

    def bn(h, g, b):
        mean = jnp.mean(h, axis=(0, 2, 3), keepdims=True)
        var = jnp.mean((h - mean) ** 2, axis=(0, 2, 3), keepdims=True)
        return ((h - mean) * lax.rsqrt(var + EPS) * g.reshape(1, -1, 1, 1)
                + b.reshape(1, -1, 1, 1))

    xf = x.astype(jnp.float32)
    h = jax.nn.relu(bn(conv(xf, p["w1"]), p["g1"], p["b1"]))
    h = bn(conv(h, p["w2"]), p["g2"], p["b2"])
    return jax.nn.relu(h + xf)


if __name__ == "__main__":
    key = jax.random.PRNGKey(0)
    N, C, H, W = 2, 16, 16, 16          # in_dimensions == out_dimensions, stride=1
    ks = jax.random.split(key, 7)

    x = jax.random.normal(ks[0], (N, C, H, W), jnp.float32)
    params = {
        "w1": 0.1 * jax.random.normal(ks[1], (C, C, 3, 3), jnp.float32),  # OIHW
        "g1": 1.0 + 0.1 * jax.random.normal(ks[2], (C,), jnp.float32),
        "b1": 0.1 * jax.random.normal(ks[3], (C,), jnp.float32),
        "w2": 0.1 * jax.random.normal(ks[4], (C, C, 3, 3), jnp.float32),
        "g2": 1.0 + 0.1 * jax.random.normal(ks[5], (C,), jnp.float32),
        "b2": 0.1 * jax.random.normal(ks[6], (C,), jnp.float32),
    }

    # f32 path (exact module semantics).
    out_f32 = jax.block_until_ready(
        basicblock_forward(x, params, stride=1, compute_dtype=jnp.float32))
    ref_f32 = jax.block_until_ready(basicblock_reference(x, params, jnp.float32))
    np.testing.assert_allclose(np.asarray(out_f32), np.asarray(ref_f32),
                               rtol=2e-2, atol=2e-2)

    # bf16 MXU-operand path (v6e/v7x perf mode); BN / residual math stays f32.
    out_bf16 = jax.block_until_ready(
        basicblock_forward(x, params, stride=1, compute_dtype=jnp.bfloat16))
    ref_bf16 = jax.block_until_ready(basicblock_reference(x, params, jnp.bfloat16))
    np.testing.assert_allclose(np.asarray(out_bf16), np.asarray(ref_bf16),
                               rtol=5e-2, atol=5e-2)

    print("KERNEL_OK")
</pallas_src>

<mosaic_0001>
module attributes {stable_mosaic.version = 11 : i64} {
  func.func @_fused_basicblock_kernel(%arg0: i32, %arg1: memref<2x16x256xf32, #tpu.memory_space<vmem>>, %arg2: memref<16x144xf32, #tpu.memory_space<vmem>>, %arg3: memref<16x144xf32, #tpu.memory_space<vmem>>, %arg4: memref<9x512xf32, #tpu.memory_space<vmem>>, %arg5: memref<16x1xf32, #tpu.memory_space<vmem>>, %arg6: memref<16x1xf32, #tpu.memory_space<vmem>>, %arg7: memref<16x1xf32, #tpu.memory_space<vmem>>, %arg8: memref<16x1xf32, #tpu.memory_space<vmem>>, %arg9: memref<2x16x256xf32, #tpu.memory_space<vmem>>) attributes {dimension_semantics = [#tpu.dimension_semantics<arbitrary>], iteration_bounds = array<i64: 1>, scalar_prefetch = 0 : i64, scratch_operands = 0 : i64, tpu.core_type = #tpu.core_type<tc>, window_params = [{pipeline_mode = #tpu.pipeline_mode<synchronous>, transform_indices = @transform_0, window_bounds = array<i64: 2, 16, 256>}, {pipeline_mode = #tpu.pipeline_mode<synchronous>, transform_indices = @transform_1, window_bounds = array<i64: 16, 144>}, {pipeline_mode = #tpu.pipeline_mode<synchronous>, transform_indices = @transform_2, window_bounds = array<i64: 16, 144>}, {pipeline_mode = #tpu.pipeline_mode<synchronous>, transform_indices = @transform_3, window_bounds = array<i64: 9, 512>}, {pipeline_mode = #tpu.pipeline_mode<synchronous>, transform_indices = @transform_4, window_bounds = array<i64: 16, 1>}, {pipeline_mode = #tpu.pipeline_mode<synchronous>, transform_indices = @transform_5, window_bounds = array<i64: 16, 1>}, {pipeline_mode = #tpu.pipeline_mode<synchronous>, transform_indices = @transform_6, window_bounds = array<i64: 16, 1>}, {pipeline_mode = #tpu.pipeline_mode<synchronous>, transform_indices = @transform_7, window_bounds = array<i64: 16, 1>}, {pipeline_mode = #tpu.pipeline_mode<synchronous>, transform_indices = @transform_8, window_bounds = array<i64: 2, 16, 256>}]} {
    %c0 = arith.constant 0 : index
    %c0_0 = arith.constant 0 : index
    %c0_1 = arith.constant 0 : index
    %0 = vector.load %arg1[%c0, %c0_0, %c0_1] : memref<2x16x256xf32, #tpu.memory_space<vmem>>, vector<1x16x256xf32>
    %1 = vector.shape_cast %0 : vector<1x16x256xf32> to vector<16x256xf32>
    %c1 = arith.constant 1 : index
    %c0_2 = arith.constant 0 : index
    %c0_3 = arith.constant 0 : index
    %2 = vector.load %arg1[%c1, %c0_2, %c0_3] : memref<2x16x256xf32, #tpu.memory_space<vmem>>, vector<1x16x256xf32>
    %3 = vector.shape_cast %2 : vector<1x16x256xf32> to vector<16x256xf32>
    %4 = tpu.concatenate %1, %3 in 1 : vector<16x256xf32>, vector<16x256xf32> -> vector<16x512xf32>
    %c17_i32 = arith.constant 17 : i32
    %5 = tpu.dynamic_rotate %4 by %c17_i32 dim 1 : vector<16x512xf32>, i32 -> vector<16x512xf32>
    %c0_4 = arith.constant 0 : index
    %c0_5 = arith.constant 0 : index
    %6 = vector.load %arg4[%c0_4, %c0_5] : memref<9x512xf32, #tpu.memory_space<vmem>>, vector<1x512xf32>
    %7 = vector.broadcast %6 : vector<1x512xf32> to vector<16x512xf32>
    %8 = arith.mulf %5, %7 : vector<16x512xf32>
    %c16_i32 = arith.constant 16 : i32
    %9 = tpu.dynamic_rotate %4 by %c16_i32 dim 1 : vector<16x512xf32>, i32 -> vector<16x512xf32>
    %c1_6 = arith.constant 1 : index
    %c0_7 = arith.constant 0 : index
    %10 = vector.load %arg4[%c1_6, %c0_7] : memref<9x512xf32, #tpu.memory_space<vmem>>, vector<1x512xf32>
    %11 = vector.broadcast %10 : vector<1x512xf32> to vector<16x512xf32>
    %12 = arith.mulf %9, %11 : vector<16x512xf32>
    %c15_i32 = arith.constant 15 : i32
    %13 = tpu.dynamic_rotate %4 by %c15_i32 dim 1 : vector<16x512xf32>, i32 -> vector<16x512xf32>
    %c2 = arith.constant 2 : index
    %c0_8 = arith.constant 0 : index
    %14 = vector.load %arg4[%c2, %c0_8] : memref<9x512xf32, #tpu.memory_space<vmem>>, vector<1x512xf32>
    %15 = vector.broadcast %14 : vector<1x512xf32> to vector<16x512xf32>
    %16 = arith.mulf %13, %15 : vector<16x512xf32>
    %c1_i32 = arith.constant 1 : i32
    %17 = tpu.dynamic_rotate %4 by %c1_i32 dim 1 : vector<16x512xf32>, i32 -> vector<16x512xf32>
    %c3 = arith.constant 3 : index
    %c0_9 = arith.constant 0 : index
    %18 = vector.load %arg4[%c3, %c0_9] : memref<9x512xf32, #tpu.memory_space<vmem>>, vector<1x512xf32>
    %19 = vector.broadcast %18 : vector<1x512xf32> to vector<16x512xf32>
    %20 = arith.mulf %17, %19 : vector<16x512xf32>
    %c511_i32 = arith.constant 511 : i32
    %21 = tpu.dynamic_rotate %4 by %c511_i32 dim 1 : vector<16x512xf32>, i32 -> vector<16x512xf32>
    %c5 = arith.constant 5 : index
    %c0_10 = arith.constant 0 : index
    %22 = vector.load %arg4[%c5, %c0_10] : memref<9x512xf32, #tpu.memory_space<vmem>>, vector<1x512xf32>
    %23 = vector.broadcast %22 : vector<1x512xf32> to vector<16x512xf32>
    %24 = arith.mulf %21, %23 : vector<16x512xf32>
    %c497_i32 = arith.constant 497 : i32
    %25 = tpu.dynamic_rotate %4 by %c497_i32 dim 1 : vector<16x512xf32>, i32 -> vector<16x512xf32>
    %c6 = arith.constant 6 : index
    %c0_11 = arith.constant 0 : index
    %26 = vector.load %arg4[%c6, %c0_11] : memref<9x512xf32, #tpu.memory_space<vmem>>, vector<1x512xf32>
    %27 = vector.broadcast %26 : vector<1x512xf32> to vector<16x512xf32>
    %28 = arith.mulf %25, %27 : vector<16x512xf32>
    %c496_i32 = arith.constant 496 : i32
    %29 = tpu.dynamic_rotate %4 by %c496_i32 dim 1 : vector<16x512xf32>, i32 -> vector<16x512xf32>
    %c7 = arith.constant 7 : index
    %c0_12 = arith.constant 0 : index
    %30 = vector.load %arg4[%c7, %c0_12] : memref<9x512xf32, #tpu.memory_space<vmem>>, vector<1x512xf32>
    %31 = vector.broadcast %30 : vector<1x512xf32> to vector<16x512xf32>
    %32 = arith.mulf %29, %31 : vector<16x512xf32>
    %c495_i32 = arith.constant 495 : i32
    %33 = tpu.dynamic_rotate %4 by %c495_i32 dim 1 : vector<16x512xf32>, i32 -> vector<16x512xf32>
    %c8 = arith.constant 8 : index
    %c0_13 = arith.constant 0 : index
    %34 = vector.load %arg4[%c8, %c0_13] : memref<9x512xf32, #tpu.memory_space<vmem>>, vector<1x512xf32>
    %35 = vector.broadcast %34 : vector<1x512xf32> to vector<16x512xf32>
    %36 = arith.mulf %33, %35 : vector<16x512xf32>
    %37 = tpu.concatenate %8, %12, %16, %20, %4, %24, %28, %32, %36 in 0 : vector<16x512xf32>, vector<16x512xf32>, vector<16x512xf32>, vector<16x512xf32>, vector<16x512xf32>, vector<16x512xf32>, vector<16x512xf32>, vector<16x512xf32>, vector<16x512xf32> -> vector<144x512xf32>
    %c0_14 = arith.constant 0 : index
    %c0_15 = arith.constant 0 : index
    %38 = vector.load %arg2[%c0_14, %c0_15] : memref<16x144xf32, #tpu.memory_space<vmem>>, vector<16x144xf32>
    %cst = arith.constant dense<0.000000e+00> : vector<16x512xf32>
    %39 = tpu.matmul %38, %37, %cst {dimension_numbers = #tpu.dot_dimension_numbers<[1], [0], [0], [1], [0, 0, 1, 1], [], []>} : vector<16x144xf32>, vector<144x512xf32>, vector<16x512xf32> -> vector<16x512xf32>
    %c0_16 = arith.constant 0 : index
    %c0_17 = arith.constant 0 : index
    %40 = vector.load %arg5[%c0_16, %c0_17] : memref<16x1xf32, #tpu.memory_space<vmem>>, vector<16x1xf32>
    %c0_18 = arith.constant 0 : index
    %c0_19 = arith.constant 0 : index
    %41 = vector.load %arg6[%c0_18, %c0_19] : memref<16x1xf32, #tpu.memory_space<vmem>>, vector<16x1xf32>
    %cst_20 = arith.constant dense<0.000000e+00> : vector<16xf32>
    %42 = vector.multi_reduction <add>, %39, %cst_20 [1] : vector<16x512xf32> to vector<16xf32>
    %43 = vector.shape_cast %42 : vector<16xf32> to vector<16x1xf32>
    %cst_21 = arith.constant 0.001953125 : f32
    %44 = vector.broadcast %cst_21 : f32 to vector<16x1xf32>
    %45 = arith.mulf %43, %44 : vector<16x1xf32>
    %46 = vector.broadcast %45 : vector<16x1xf32> to vector<16x512xf32>
    %47 = arith.subf %39, %46 : vector<16x512xf32>
    %48 = arith.mulf %47, %47 : vector<16x512xf32>
    %cst_22 = arith.constant dense<0.000000e+00> : vector<16xf32>
    %49 = vector.multi_reduction <add>, %48, %cst_22 [1] : vector<16x512xf32> to vector<16xf32>
    %50 = vector.shape_cast %49 : vector<16xf32> to vector<16x1xf32>
    %cst_23 = arith.constant 0.001953125 : f32
    %51 = vector.broadcast %cst_23 : f32 to vector<16x1xf32>
    %52 = arith.mulf %50, %51 : vector<16x1xf32>
    %cst_24 = arith.constant 9.99999974E-6 : f32
    %53 = vector.broadcast %cst_24 : f32 to vector<16x1xf32>
    %54 = arith.addf %52, %53 : vector<16x1xf32>
    %55 = math.rsqrt %54 : vector<16x1xf32>
    %56 = arith.mulf %40, %55 : vector<16x1xf32>
    %57 = vector.broadcast %56 : vector<16x1xf32> to vector<16x512xf32>
    %58 = arith.mulf %47, %57 : vector<16x512xf32>
    %59 = vector.broadcast %41 : vector<16x1xf32> to vector<16x512xf32>
    %60 = arith.addf %58, %59 : vector<16x512xf32>
    %cst_25 = arith.constant 0.000000e+00 : f32
    %61 = vector.broadcast %cst_25 : f32 to vector<16x512xf32>
    %62 = arith.maximumf %60, %61 : vector<16x512xf32>
    %c17_i32_26 = arith.constant 17 : i32
    %63 = tpu.dynamic_rotate %62 by %c17_i32_26 dim 1 : vector<16x512xf32>, i32 -> vector<16x512xf32>
    %c0_27 = arith.constant 0 : index
    %c0_28 = arith.constant 0 : index
    %64 = vector.load %arg4[%c0_27, %c0_28] : memref<9x512xf32, #tpu.memory_space<vmem>>, vector<1x512xf32>
    %65 = vector.broadcast %64 : vector<1x512xf32> to vector<16x512xf32>
    %66 = arith.mulf %63, %65 : vector<16x512xf32>
    %c16_i32_29 = arith.constant 16 : i32
    %67 = tpu.dynamic_rotate %62 by %c16_i32_29 dim 1 : vector<16x512xf32>, i32 -> vector<16x512xf32>
    %c1_30 = arith.constant 1 : index
    %c0_31 = arith.constant 0 : index
    %68 = vector.load %arg4[%c1_30, %c0_31] : memref<9x512xf32, #tpu.memory_space<vmem>>, vector<1x512xf32>
    %69 = vector.broadcast %68 : vector<1x512xf32> to vector<16x512xf32>
    %70 = arith.mulf %67, %69 : vector<16x512xf32>
    %c15_i32_32 = arith.constant 15 : i32
    %71 = tpu.dynamic_rotate %62 by %c15_i32_32 dim 1 : vector<16x512xf32>, i32 -> vector<16x512xf32>
    %c2_33 = arith.constant 2 : index
    %c0_34 = arith.constant 0 : index
    %72 = vector.load %arg4[%c2_33, %c0_34] : memref<9x512xf32, #tpu.memory_space<vmem>>, vector<1x512xf32>
    %73 = vector.broadcast %72 : vector<1x512xf32> to vector<16x512xf32>
    %74 = arith.mulf %71, %73 : vector<16x512xf32>
    %c1_i32_35 = arith.constant 1 : i32
    %75 = tpu.dynamic_rotate %62 by %c1_i32_35 dim 1 : vector<16x512xf32>, i32 -> vector<16x512xf32>
    %c3_36 = arith.constant 3 : index
    %c0_37 = arith.constant 0 : index
    %76 = vector.load %arg4[%c3_36, %c0_37] : memref<9x512xf32, #tpu.memory_space<vmem>>, vector<1x512xf32>
    %77 = vector.broadcast %76 : vector<1x512xf32> to vector<16x512xf32>
    %78 = arith.mulf %75, %77 : vector<16x512xf32>
    %c511_i32_38 = arith.constant 511 : i32
    %79 = tpu.dynamic_rotate %62 by %c511_i32_38 dim 1 : vector<16x512xf32>, i32 -> vector<16x512xf32>
    %c5_39 = arith.constant 5 : index
    %c0_40 = arith.constant 0 : index
    %80 = vector.load %arg4[%c5_39, %c0_40] : memref<9x512xf32, #tpu.memory_space<vmem>>, vector<1x512xf32>
    %81 = vector.broadcast %80 : vector<1x512xf32> to vector<16x512xf32>
    %82 = arith.mulf %79, %81 : vector<16x512xf32>
    %c497_i32_41 = arith.constant 497 : i32
    %83 = tpu.dynamic_rotate %62 by %c497_i32_41 dim 1 : vector<16x512xf32>, i32 -> vector<16x512xf32>
    %c6_42 = arith.constant 6 : index
    %c0_43 = arith.constant 0 : index
    %84 = vector.load %arg4[%c6_42, %c0_43] : memref<9x512xf32, #tpu.memory_space<vmem>>, vector<1x512xf32>
    %85 = vector.broadcast %84 : vector<1x512xf32> to vector<16x512xf32>
    %86 = arith.mulf %83, %85 : vector<16x512xf32>
    %c496_i32_44 = arith.constant 496 : i32
    %87 = tpu.dynamic_rotate %62 by %c496_i32_44 dim 1 : vector<16x512xf32>, i32 -> vector<16x512xf32>
    %c7_45 = arith.constant 7 : index
    %c0_46 = arith.constant 0 : index
    %88 = vector.load %arg4[%c7_45, %c0_46] : memref<9x512xf32, #tpu.memory_space<vmem>>, vector<1x512xf32>
    %89 = vector.broadcast %88 : vector<1x512xf32> to vector<16x512xf32>
    %90 = arith.mulf %87, %89 : vector<16x512xf32>
    %c495_i32_47 = arith.constant 495 : i32
    %91 = tpu.dynamic_rotate %62 by %c495_i32_47 dim 1 : vector<16x512xf32>, i32 -> vector<16x512xf32>
    %c8_48 = arith.constant 8 : index
    %c0_49 = arith.constant 0 : index
    %92 = vector.load %arg4[%c8_48, %c0_49] : memref<9x512xf32, #tpu.memory_space<vmem>>, vector<1x512xf32>
    %93 = vector.broadcast %92 : vector<1x512xf32> to vector<16x512xf32>
    %94 = arith.mulf %91, %93 : vector<16x512xf32>
    %95 = tpu.concatenate %66, %70, %74, %78, %62, %82, %86, %90, %94 in 0 : vector<16x512xf32>, vector<16x512xf32>, vector<16x512xf32>, vector<16x512xf32>, vector<16x512xf32>, vector<16x512xf32>, vector<16x512xf32>, vector<16x512xf32>, vector<16x512xf32> -> vector<144x512xf32>
    %c0_50 = arith.constant 0 : index
    %c0_51 = arith.constant 0 : index
    %96 = vector.load %arg3[%c0_50, %c0_51] : memref<16x144xf32, #tpu.memory_space<vmem>>, vector<16x144xf32>
    %cst_52 = arith.constant dense<0.000000e+00> : vector<16x512xf32>
    %97 = tpu.matmul %96, %95, %cst_52 {dimension_numbers = #tpu.dot_dimension_numbers<[1], [0], [0], [1], [0, 0, 1, 1], [], []>} : vector<16x144xf32>, vector<144x512xf32>, vector<16x512xf32> -> vector<16x512xf32>
    %c0_53 = arith.constant 0 : index
    %c0_54 = arith.constant 0 : index
    %98 = vector.load %arg7[%c0_53, %c0_54] : memref<16x1xf32, #tpu.memory_space<vmem>>, vector<16x1xf32>
    %c0_55 = arith.constant 0 : index
    %c0_56 = arith.constant 0 : index
    %99 = vector.load %arg8[%c0_55, %c0_56] : memref<16x1xf32, #tpu.memory_space<vmem>>, vector<16x1xf32>
    %cst_57 = arith.constant dense<0.000000e+00> : vector<16xf32>
    %100 = vector.multi_reduction <add>, %97, %cst_57 [1] : vector<16x512xf32> to vector<16xf32>
    %101 = vector.shape_cast %100 : vector<16xf32> to vector<16x1xf32>
    %cst_58 = arith.constant 0.001953125 : f32
    %102 = vector.broadcast %cst_58 : f32 to vector<16x1xf32>
    %103 = arith.mulf %101, %102 : vector<16x1xf32>
    %104 = vector.broadcast %103 : vector<16x1xf32> to vector<16x512xf32>
    %105 = arith.subf %97, %104 : vector<16x512xf32>
    %106 = arith.mulf %105, %105 : vector<16x512xf32>
    %cst_59 = arith.constant dense<0.000000e+00> : vector<16xf32>
    %107 = vector.multi_reduction <add>, %106, %cst_59 [1] : vector<16x512xf32> to vector<16xf32>
    %108 = vector.shape_cast %107 : vector<16xf32> to vector<16x1xf32>
    %cst_60 = arith.constant 0.001953125 : f32
    %109 = vector.broadcast %cst_60 : f32 to vector<16x1xf32>
    %110 = arith.mulf %108, %109 : vector<16x1xf32>
    %cst_61 = arith.constant 9.99999974E-6 : f32
    %111 = vector.broadcast %cst_61 : f32 to vector<16x1xf32>
    %112 = arith.addf %110, %111 : vector<16x1xf32>
    %113 = math.rsqrt %112 : vector<16x1xf32>
    %114 = arith.mulf %98, %113 : vector<16x1xf32>
    %115 = vector.broadcast %114 : vector<16x1xf32> to vector<16x512xf32>
    %116 = arith.mulf %105, %115 : vector<16x512xf32>
    %117 = vector.broadcast %99 : vector<16x1xf32> to vector<16x512xf32>
    %118 = arith.addf %116, %117 : vector<16x512xf32>
    %119 = arith.addf %118, %4 : vector<16x512xf32>
    %cst_62 = arith.constant 0.000000e+00 : f32
    %120 = vector.broadcast %cst_62 : f32 to vector<16x512xf32>
    %121 = arith.maximumf %119, %120 : vector<16x512xf32>
    %122 = vector.extract_strided_slice %121 {offsets = [0, 0], sizes = [16, 256], strides = [1, 1]} : vector<16x512xf32> to vector<16x256xf32>
    %c0_63 = arith.constant 0 : index
    %c0_64 = arith.constant 0 : index
    %c0_65 = arith.constant 0 : index
    %123 = vector.load %arg9[%c0_63, %c0_64, %c0_65] : memref<2x16x256xf32, #tpu.memory_space<vmem>>, vector<1x16x256xf32>
    %124 = vector.shape_cast %123 : vector<1x16x256xf32> to vector<16x256xf32>
    %125 = vector.shape_cast %122 : vector<16x256xf32> to vector<1x16x256xf32>
    tpu.vector_store %arg9[%c0_63, %c0_64, %c0_65], %125 {strides = array<i32>} : memref<2x16x256xf32, #tpu.memory_space<vmem>>, vector<1x16x256xf32>,
    %126 = vector.extract_strided_slice %121 {offsets = [0, 256], sizes = [16, 256], strides = [1, 1]} : vector<16x512xf32> to vector<16x256xf32>
    %c1_66 = arith.constant 1 : index
    %c0_67 = arith.constant 0 : index
    %c0_68 = arith.constant 0 : index
    %127 = vector.load %arg9[%c1_66, %c0_67, %c0_68] : memref<2x16x256xf32, #tpu.memory_space<vmem>>, vector<1x16x256xf32>
    %128 = vector.shape_cast %127 : vector<1x16x256xf32> to vector<16x256xf32>
    %129 = vector.shape_cast %126 : vector<16x256xf32> to vector<1x16x256xf32>
    tpu.vector_store %arg9[%c1_66, %c0_67, %c0_68], %129 {strides = array<i32>} : memref<2x16x256xf32, #tpu.memory_space<vmem>>, vector<1x16x256xf32>,
    return
  }
  func.func @transform_0(%arg0: i32) -> (i32, i32, i32) {
    %c0_i32 = arith.constant 0 : i32
    %c0_i32_0 = arith.constant 0 : i32
    %c0_i32_1 = arith.constant 0 : i32
    %c0_i32_2 = arith.constant 0 : i32
    return %c0_i32, %c0_i32_0, %c0_i32_1 : i32, i32, i32
  }
  func.func @transform_1(%arg0: i32) -> (i32, i32) {
    %c0_i32 = arith.constant 0 : i32
    %c0_i32_0 = arith.constant 0 : i32
    %c0_i32_1 = arith.constant 0 : i32
    return %c0_i32, %c0_i32_0 : i32, i32
  }
  func.func @transform_2(%arg0: i32) -> (i32, i32) {
    %c0_i32 = arith.constant 0 : i32
    %c0_i32_0 = arith.constant 0 : i32
    %c0_i32_1 = arith.constant 0 : i32
    return %c0_i32, %c0_i32_0 : i32, i32
  }
  func.func @transform_3(%arg0: i32) -> (i32, i32) {
    %c0_i32 = arith.constant 0 : i32
    %c0_i32_0 = arith.constant 0 : i32
    %c0_i32_1 = arith.constant 0 : i32
    return %c0_i32, %c0_i32_0 : i32, i32
  }
  func.func @transform_4(%arg0: i32) -> (i32, i32) {
    %c0_i32 = arith.constant 0 : i32
    %c0_i32_0 = arith.constant 0 : i32
    %c0_i32_1 = arith.constant 0 : i32
    return %c0_i32, %c0_i32_0 : i32, i32
  }
  func.func @transform_5(%arg0: i32) -> (i32, i32) {
    %c0_i32 = arith.constant 0 : i32
    %c0_i32_0 = arith.constant 0 : i32
    %c0_i32_1 = arith.constant 0 : i32
    return %c0_i32, %c0_i32_0 : i32, i32
  }
  func.func @transform_6(%arg0: i32) -> (i32, i32) {
    %c0_i32 = arith.constant 0 : i32
    %c0_i32_0 = arith.constant 0 : i32
    %c0_i32_1 = arith.constant 0 : i32
    return %c0_i32, %c0_i32_0 : i32, i32
  }
  func.func @transform_7(%arg0: i32) -> (i32, i32) {
    %c0_i32 = arith.constant 0 : i32
    %c0_i32_0 = arith.constant 0 : i32
    %c0_i32_1 = arith.constant 0 : i32
    return %c0_i32, %c0_i32_0 : i32, i32
  }
  func.func @transform_8(%arg0: i32) -> (i32, i32, i32) {
    %c0_i32 = arith.constant 0 : i32
    %c0_i32_0 = arith.constant 0 : i32
    %c0_i32_1 = arith.constant 0 : i32
    %c0_i32_2 = arith.constant 0 : i32
    return %c0_i32, %c0_i32_0, %c0_i32_1 : i32, i32, i32
  }
}

</mosaic_0001>

<llo_original>
// kernel: tpu_custom_call.1
$region0: #{tpu_custom_call.1}
  #allocation0 [shape = 'u32[]', space=smem, size = 0x4, offset = 0x4, fixed_abs, tag = 'smem constant byte address 0x4 - core index']
  #allocation1 [shape = 'u32[144,128]{1,0:T(1,128)}', space=vmem, size = 0x12000, scoped, tag = 'internal scratch']
  %s0 = inlined_call_operand.vmem [shape: f32[2,16,256], index: 0, kind: input, shape index: {}]
  %s1 = inlined_call_operand.hbm [shape: f32[16,144], index: 1, kind: input, shape index: {}]
  %s2 = inlined_call_operand.hbm [shape: f32[16,144], index: 2, kind: input, shape index: {}]
  %s3 = inlined_call_operand.hbm [shape: f32[9,512], index: 3, kind: input, shape index: {}]
  %s4 = inlined_call_operand.vmem [shape: f32[16,1], index: 4, kind: input, shape index: {}]
  %s5 = inlined_call_operand.vmem [shape: f32[16,1], index: 5, kind: input, shape index: {}]
  %s6 = inlined_call_operand.vmem [shape: f32[16,1], index: 6, kind: input, shape index: {}]
  %s7 = inlined_call_operand.vmem [shape: f32[16,1], index: 7, kind: input, shape index: {}]
  %s8 = inlined_call_operand.hbm [shape: f32[2,16,256], index: 8, kind: output, shape index: {}]
  %s9 = sld [smem:[#allocation0]]
  $region54: #{tpu_custom_call.1} parent=0
    _
  %s11 = ssub.s32 1, %s9
  %s12 = scalar_select 0, %s11, %s9
  $region1: #{tpu_custom_call.1} parent=0
    #allocation2 [shape = 'u8[16384]{0}', space=vmem, size = 0x4000, scoped, tag = 'input window, operand 1, single buffered']
    #allocation3 [shape = 's32[1]{0}', space=sflag, size = 0x4, scoped, tag = 'scoped memory for tpu_custom_call.1']
    #allocation4 [shape = 's32[1]{0}', space=sflag, size = 0x4, scoped, tag = 'scoped memory for tpu_custom_call.1']
    #allocation5 [shape = 'u8[16384]{0}', space=vmem, size = 0x4000, scoped, tag = 'input window, operand 2, single buffered']
    #allocation6 [shape = 's32[1]{0}', space=sflag, size = 0x4, scoped, tag = 'scoped memory for tpu_custom_call.1']
    #allocation7 [shape = 'u8[32768]{0}', space=vmem, size = 0x8000, scoped, tag = 'input window, operand 3, single buffered']
    #allocation8 [shape = 'u8[32768]{0}', space=vmem, size = 0x8000, scoped, tag = 'output window, operand 0, single buffered']
    %13 = vsyncpa [#allocation3], 0
    %14 = vsyncpa [#allocation6], 0
    %15 = vsyncpa [#allocation4], 0
    // Predicated region
    $region2: #{tpu_custom_call.1} parent=1 // pred_check
      _
    $region3: #{tpu_custom_call.1} parent=1 // pred_check_branch
      %17 = sbr.rel (0) target = $region5
    $region4: #{tpu_custom_call.1} parent=1 // pred_region
      _
    $region5: #{tpu_custom_call.1} parent=1 // pred_fallthru
      _
    // Predicated region
    $region6: #{tpu_custom_call.1} parent=1 // pred_check
      _
    $region7: #{tpu_custom_call.1} parent=1 // pred_check_branch
      %19 = sbr.rel (0) target = $region9
    $region8: #{tpu_custom_call.1} parent=1 // pred_region
      %s21 = ssub.s32 512, 512
      %22 = vsyncadd [#allocation3], %s21
      %s23 = sshll.u32 [#allocation2], 4
      %s24 = int_to_ptr.vmem [resolvable:$true] %s23
      %29 = dma.hbm_to_vmem [thread:$0]  %s1, 512, %s24, [#allocation3], 256, 256, 16
    $region9: #{tpu_custom_call.1} parent=1 // pred_fallthru
      _
    // Predicated region
    $region10: #{tpu_custom_call.1} parent=1 // pred_check
      _
    $region11: #{tpu_custom_call.1} parent=1 // pred_check_branch
      %31 = sbr.rel (0) target = $region13
    $region12: #{tpu_custom_call.1} parent=1 // pred_region
      %s33 = ssub.s32 512, 512
      %34 = vsyncadd [#allocation6], %s33
      %s35 = sshll.u32 [#allocation5], 4
      %s36 = int_to_ptr.vmem [resolvable:$true] %s35
      %41 = dma.hbm_to_vmem [thread:$0]  %s2, 512, %s36, [#allocation6], 256, 256, 16
    $region13: #{tpu_custom_call.1} parent=1 // pred_fallthru
      _
    // Predicated region
    $region14: #{tpu_custom_call.1} parent=1 // pred_check
      _
    $region15: #{tpu_custom_call.1} parent=1 // pred_check_branch
      %43 = sbr.rel (0) target = $region17
    $region16: #{tpu_custom_call.1} parent=1 // pred_region
      %s45 = ssub.s32 1024, 1024
      %46 = vsyncadd [#allocation6], %s45
      %s47 = sshll.u32 [#allocation7], 4
      %s48 = int_to_ptr.vmem [resolvable:$true] %s47
      %53 = dma.hbm_to_vmem [thread:$0]  %s3, 1024, %s48, [#allocation6], 512, 512, 32
    $region17: #{tpu_custom_call.1} parent=1 // pred_fallthru
      _
    // Predicated region
    $region18: #{tpu_custom_call.1} parent=1 // pred_check
      _
    $region19: #{tpu_custom_call.1} parent=1 // pred_check_branch
      %55 = sbr.rel (0) target = $region21
    $region20: #{tpu_custom_call.1} parent=1 // pred_region
      _
    $region21: #{tpu_custom_call.1} parent=1 // pred_fallthru
      _
    // Predicated region
    $region22: #{tpu_custom_call.1} parent=1 // pred_check
      _
    $region23: #{tpu_custom_call.1} parent=1 // pred_check_branch
      %57 = sbr.rel (0) target = $region25
    $region24: #{tpu_custom_call.1} parent=1 // pred_region
      _
    $region25: #{tpu_custom_call.1} parent=1 // pred_fallthru
      _
    // Predicated region
    $region26: #{tpu_custom_call.1} parent=1 // pred_check
      _
    $region27: #{tpu_custom_call.1} parent=1 // pred_check_branch
      %59 = sbr.rel (0) target = $region29
    $region28: #{tpu_custom_call.1} parent=1 // pred_region
      _
    $region29: #{tpu_custom_call.1} parent=1 // pred_fallthru
      _
    // Predicated region
    $region30: #{tpu_custom_call.1} parent=1 // pred_check
      _
    $region31: #{tpu_custom_call.1} parent=1 // pred_check_branch
      %61 = sbr.rel (0) target = $region33
    $region32: #{tpu_custom_call.1} parent=1 // pred_region
      _
    $region33: #{tpu_custom_call.1} parent=1 // pred_fallthru
      _
    // Predicated region
    $region34: #{tpu_custom_call.1} parent=1 // pred_check
      _
    $region35: #{tpu_custom_call.1} parent=1 // pred_check_branch
      %63 = sbr.rel (0) target = $region37
    $region36: #{tpu_custom_call.1} parent=1 // pred_region
      %64 = dma.done [#allocation3], 512
    $region37: #{tpu_custom_call.1} parent=1 // pred_fallthru
      _
    // Predicated region
    $region38: #{tpu_custom_call.1} parent=1 // pred_check
      _
    $region39: #{tpu_custom_call.1} parent=1 // pred_check_branch
      %66 = sbr.rel (0) target = $region41
    $region40: #{tpu_custom_call.1} parent=1 // pred_region
      %67 = dma.done [#allocation6], 512
    $region41: #{tpu_custom_call.1} parent=1 // pred_fallthru
      _
    // Predicated region
    $region42: #{tpu_custom_call.1} parent=1 // pred_check
      _
    $region43: #{tpu_custom_call.1} parent=1 // pred_check_branch
      %69 = sbr.rel (0) target = $region45
    $region44: #{tpu_custom_call.1} parent=1 // pred_region
      %70 = dma.done [#allocation6], 1024
    $region45: #{tpu_custom_call.1} parent=1 // pred_fallthru
      _
    %v71 = vld [vmem:[%s0] sm:$0xff]
    %v72 = vld [vmem:[%s0 + $0x8] sm:$0xff]
    %v73 = vld [vmem:[%s0 + $0x10] sm:$0xff]
    %v74 = vld [vmem:[%s0 + $0x18] sm:$0xff]
    %s75 = scalar_lea.vmem %s0, 32
    %v76 = vld [vmem:[%s75] sm:$0xff]
    %v77 = vld [vmem:[%s75 + $0x8] sm:$0xff]
    %v78 = vld [vmem:[%s75 + $0x10] sm:$0xff]
    %v79 = vld [vmem:[%s75 + $0x18] sm:$0xff]
    %80 = vrot.lane.b32.xlu0 %v71, 17
    %v81 = vpop.permute.xlu0 %80
    %82 = vrot.lane.b32.xlu0 %v73, 17
    %v83 = vpop.permute.xlu0 %82
    %84 = vrot.lane.b32.xlu0 %v72, 17
    %v85 = vpop.permute.xlu0 %84
    %86 = vrot.lane.b32.xlu0 %v74, 17
    %v87 = vpop.permute.xlu0 %86
    %88 = vrot.lane.b32.xlu0 %v76, 17
    %v89 = vpop.permute.xlu0 %88
    %90 = vrot.lane.b32.xlu0 %v78, 17
    %v91 = vpop.permute.xlu0 %90
    %92 = vrot.lane.b32.xlu0 %v77, 17
    %v93 = vpop.permute.xlu0 %92
    %94 = vrot.lane.b32.xlu0 %v79, 17
    %v95 = vpop.permute.xlu0 %94
    %v96 = vlaneseq
    %v97 = vand.u32 %v96, 127
    %vm98 = vcmp.lt.s32.totalorder %v97, 17
    %v99 = vsel %vm98, %v89, %v93
    %v100 = vsel %vm98, %v91, %v95
    %v101 = vsel %vm98, %v85, %v89
    %v102 = vsel %vm98, %v87, %v91
    %v103 = vsel %vm98, %v81, %v85
    %v104 = vsel %vm98, %v83, %v87
    %v105 = vsel %vm98, %v93, %v81
    %v106 = vsel %vm98, %v95, %v83
    %v107 = vld [vmem:[#allocation7] ss:$8 sm:$0xf]
    %v109 = vlaneseq
    %v110 = vshrl.u32 %v109, 7
    %v111 = vsub.s32 0, %v110
    %v112 = vrot.slane %v107, %v111
    %v113 = vlaneseq
    %v114 = vshrl.u32 %v113, 7
    %v115 = vsub.s32 1, %v114
    %v116 = vrot.slane %v107, %v115
    %v117 = vlaneseq
    %v118 = vshrl.u32 %v117, 7
    %v119 = vsub.s32 2, %v118
    %v120 = vrot.slane %v107, %v119
    %v121 = vlaneseq
    %v122 = vshrl.u32 %v121, 7
    %v123 = vsub.s32 3, %v122
    %v124 = vrot.slane %v107, %v123
    %v129 = vmul.f32 %v105, %v112
    %v130 = vmul.f32 %v103, %v116
    %v131 = vmul.f32 %v101, %v120
    %v132 = vmul.f32 %v99, %v124
    %v133 = vmul.f32 %v106, %v112
    %v134 = vmul.f32 %v104, %v116
    %v135 = vmul.f32 %v102, %v120
    %v136 = vmul.f32 %v100, %v124
    %137 = vrot.lane.b32.xlu0 %v71, 16
    %v138 = vpop.permute.xlu0 %137
    %139 = vrot.lane.b32.xlu0 %v73, 16
    %v140 = vpop.permute.xlu0 %139
    %141 = vrot.lane.b32.xlu0 %v72, 16
    %v142 = vpop.permute.xlu0 %141
    %143 = vrot.lane.b32.xlu0 %v74, 16
    %v144 = vpop.permute.xlu0 %143
    %145 = vrot.lane.b32.xlu0 %v76, 16
    %v146 = vpop.permute.xlu0 %145
    %147 = vrot.lane.b32.xlu0 %v78, 16
    %v148 = vpop.permute.xlu0 %147
    %149 = vrot.lane.b32.xlu0 %v77, 16
    %v150 = vpop.permute.xlu0 %149
    %151 = vrot.lane.b32.xlu0 %v79, 16
    %v152 = vpop.permute.xlu0 %151
    %vm153 = vcmp.lt.s32.totalorder %v97, 16
    %v154 = vsel %vm153, %v146, %v150
    %v155 = vsel %vm153, %v148, %v152
    %v156 = vsel %vm153, %v142, %v146
    %v157 = vsel %vm153, %v144, %v148
    %v158 = vsel %vm153, %v138, %v142
    %v159 = vsel %vm153, %v140, %v144
    %v160 = vsel %vm153, %v150, %v138
    %v161 = vsel %vm153, %v152, %v140
    %s162 = scalar_lea.vmem [#allocation7], 1
    %v163 = vld [vmem:[%s162] ss:$8 sm:$0xf]
    %v165 = vlaneseq
    %v166 = vshrl.u32 %v165, 7
    %v167 = vsub.s32 0, %v166
    %v168 = vrot.slane %v163, %v167
    %v169 = vlaneseq
    %v170 = vshrl.u32 %v169, 7
    %v171 = vsub.s32 1, %v170
    %v172 = vrot.slane %v163, %v171
    %v173 = vlaneseq
    %v174 = vshrl.u32 %v173, 7
    %v175 = vsub.s32 2, %v174
    %v176 = vrot.slane %v163, %v175
    %v177 = vlaneseq
    %v178 = vshrl.u32 %v177, 7
    %v179 = vsub.s32 3, %v178
    %v180 = vrot.slane %v163, %v179
    %v185 = vmul.f32 %v160, %v168
    %v186 = vmul.f32 %v158, %v172
    %v187 = vmul.f32 %v156, %v176
    %v188 = vmul.f32 %v154, %v180
    %v189 = vmul.f32 %v161, %v168
    %v190 = vmul.f32 %v159, %v172
    %v191 = vmul.f32 %v157, %v176
    %v192 = vmul.f32 %v155, %v180
    %193 = vrot.lane.b32.xlu0 %v71, 15
    %v194 = vpop.permute.xlu0 %193
    %195 = vrot.lane.b32.xlu0 %v73, 15
    %v196 = vpop.permute.xlu0 %195
    %197 = vrot.lane.b32.xlu0 %v72, 15
    %v198 = vpop.permute.xlu0 %197
    %199 = vrot.lane.b32.xlu0 %v74, 15
    %v200 = vpop.permute.xlu0 %199
    %201 = vrot.lane.b32.xlu0 %v76, 15
    %v202 = vpop.permute.xlu0 %201
    %203 = vrot.lane.b32.xlu0 %v78, 15
    %v204 = vpop.permute.xlu0 %203
    %205 = vrot.lane.b32.xlu0 %v77, 15
    %v206 = vpop.permute.xlu0 %205
    %207 = vrot.lane.b32.xlu0 %v79, 15
    %v208 = vpop.permute.xlu0 %207
    %vm209 = vcmp.lt.s32.totalorder %v97, 15
    %v210 = vsel %vm209, %v202, %v206
    %v211 = vsel %vm209, %v204, %v208
    %v212 = vsel %vm209, %v198, %v202
    %v213 = vsel %vm209, %v200, %v204
    %v214 = vsel %vm209, %v194, %v198
    %v215 = vsel %vm209, %v196, %v200
    %v216 = vsel %vm209, %v206, %v194
    %v217 = vsel %vm209, %v208, %v196
    %s218 = scalar_lea.vmem [#allocation7], 2
    %v219 = vld [vmem:[%s218] ss:$8 sm:$0xf]
    %v221 = vlaneseq
    %v222 = vshrl.u32 %v221, 7
    %v223 = vsub.s32 0, %v222
    %v224 = vrot.slane %v219, %v223
    %v225 = vlaneseq
    %v226 = vshrl.u32 %v225, 7
    %v227 = vsub.s32 1, %v226
    %v228 = vrot.slane %v219, %v227
    %v229 = vlaneseq
    %v230 = vshrl.u32 %v229, 7
    %v231 = vsub.s32 2, %v230
    %v232 = vrot.slane %v219, %v231
    %v233 = vlaneseq
    %v234 = vshrl.u32 %v233, 7
    %v235 = vsub.s32 3, %v234
    %v236 = vrot.slane %v219, %v235
    %v241 = vmul.f32 %v216, %v224
    %v242 = vmul.f32 %v214, %v228
    %v243 = vmul.f32 %v212, %v232
    %v244 = vmul.f32 %v210, %v236
    %v245 = vmul.f32 %v217, %v224
    %v246 = vmul.f32 %v215, %v228
    %v247 = vmul.f32 %v213, %v232
    %v248 = vmul.f32 %v211, %v236
    %249 = vrot.lane.b32.xlu0 %v71, 1
    %v250 = vpop.permute.xlu0 %249
    %251 = vrot.lane.b32.xlu0 %v73, 1
    %v252 = vpop.permute.xlu0 %251
    %253 = vrot.lane.b32.xlu0 %v72, 1
    %v254 = vpop.permute.xlu0 %253
    %255 = vrot.lane.b32.xlu0 %v74, 1
    %v256 = vpop.permute.xlu0 %255
    %257 = vrot.lane.b32.xlu0 %v76, 1
    %v258 = vpop.permute.xlu0 %257
    %259 = vrot.lane.b32.xlu0 %v78, 1
    %v260 = vpop.permute.xlu0 %259
    %261 = vrot.lane.b32.xlu0 %v77, 1
    %v262 = vpop.permute.xlu0 %261
    %263 = vrot.lane.b32.xlu0 %v79, 1
    %v264 = vpop.permute.xlu0 %263
    %vm265 = vcmp.lt.s32.totalorder %v97, 1
    %v266 = vsel %vm265, %v258, %v262
    %v267 = vsel %vm265, %v260, %v264
    %v268 = vsel %vm265, %v254, %v258
    %v269 = vsel %vm265, %v256, %v260
    %v270 = vsel %vm265, %v250, %v254
    %v271 = vsel %vm265, %v252, %v256
    %v272 = vsel %vm265, %v262, %v250
    %v273 = vsel %vm265, %v264, %v252
    %s274 = scalar_lea.vmem [#allocation7], 3
    %v275 = vld [vmem:[%s274] ss:$8 sm:$0xf]
    %v277 = vlaneseq
    %v278 = vshrl.u32 %v277, 7
    %v279 = vsub.s32 0, %v278
    %v280 = vrot.slane %v275, %v279
    %v281 = vlaneseq
    %v282 = vshrl.u32 %v281, 7
    %v283 = vsub.s32 1, %v282
    %v284 = vrot.slane %v275, %v283
    %v285 = vlaneseq
    %v286 = vshrl.u32 %v285, 7
    %v287 = vsub.s32 2, %v286
    %v288 = vrot.slane %v275, %v287
    %v289 = vlaneseq
    %v290 = vshrl.u32 %v289, 7
    %v291 = vsub.s32 3, %v290
    %v292 = vrot.slane %v275, %v291
    %v297 = vmul.f32 %v272, %v280
    %v298 = vmul.f32 %v270, %v284
    %v299 = vmul.f32 %v268, %v288
    %v300 = vmul.f32 %v266, %v292
    %v301 = vmul.f32 %v273, %v280
    %v302 = vmul.f32 %v271, %v284
    %v303 = vmul.f32 %v269, %v288
    %v304 = vmul.f32 %v267, %v292
    %305 = vrot.lane.b32.xlu0 %v71, 127
    %v306 = vpop.permute.xlu0 %305
    %307 = vrot.lane.b32.xlu0 %v73, 127
    %v308 = vpop.permute.xlu0 %307
    %309 = vrot.lane.b32.xlu0 %v72, 127
    %v310 = vpop.permute.xlu0 %309
    %311 = vrot.lane.b32.xlu0 %v74, 127
    %v312 = vpop.permute.xlu0 %311
    %313 = vrot.lane.b32.xlu0 %v76, 127
    %v314 = vpop.permute.xlu0 %313
    %315 = vrot.lane.b32.xlu0 %v78, 127
    %v316 = vpop.permute.xlu0 %315
    %317 = vrot.lane.b32.xlu0 %v77, 127
    %v318 = vpop.permute.xlu0 %317
    %319 = vrot.lane.b32.xlu0 %v79, 127
    %v320 = vpop.permute.xlu0 %319
    %vm321 = vcmp.lt.s32.totalorder %v97, 127
    %v322 = vsel %vm321, %v314, %v318
    %v323 = vsel %vm321, %v316, %v320
    %v324 = vsel %vm321, %v310, %v314
    %v325 = vsel %vm321, %v312, %v316
    %v326 = vsel %vm321, %v306, %v310
    %v327 = vsel %vm321, %v308, %v312
    %v328 = vsel %vm321, %v318, %v306
    %v329 = vsel %vm321, %v320, %v308
    %s330 = scalar_lea.vmem [#allocation7], 5
    %v331 = vld [vmem:[%s330] ss:$8 sm:$0xf]
    %v333 = vlaneseq
    %v334 = vshrl.u32 %v333, 7
    %v335 = vsub.s32 0, %v334
    %v336 = vrot.slane %v331, %v335
    %v337 = vlaneseq
    %v338 = vshrl.u32 %v337, 7
    %v339 = vsub.s32 1, %v338
    %v340 = vrot.slane %v331, %v339
    %v341 = vlaneseq
    %v342 = vshrl.u32 %v341, 7
    %v343 = vsub.s32 2, %v342
    %v344 = vrot.slane %v331, %v343
    %v345 = vlaneseq
    %v346 = vshrl.u32 %v345, 7
    %v347 = vsub.s32 3, %v346
    %v348 = vrot.slane %v331, %v347
    %v353 = vmul.f32 %v326, %v336
    %v354 = vmul.f32 %v324, %v340
    %v355 = vmul.f32 %v322, %v344
    %v356 = vmul.f32 %v328, %v348
    %v357 = vmul.f32 %v327, %v336
    %v358 = vmul.f32 %v325, %v340
    %v359 = vmul.f32 %v323, %v344
    %v360 = vmul.f32 %v329, %v348
    %361 = vrot.lane.b32.xlu0 %v71, 113
    %v362 = vpop.permute.xlu0 %361
    %363 = vrot.lane.b32.xlu0 %v73, 113
    %v364 = vpop.permute.xlu0 %363
    %365 = vrot.lane.b32.xlu0 %v72, 113
    %v366 = vpop.permute.xlu0 %365
    %367 = vrot.lane.b32.xlu0 %v74, 113
    %v368 = vpop.permute.xlu0 %367
    %369 = vrot.lane.b32.xlu0 %v76, 113
    %v370 = vpop.permute.xlu0 %369
    %371 = vrot.lane.b32.xlu0 %v78, 113
    %v372 = vpop.permute.xlu0 %371
    %373 = vrot.lane.b32.xlu0 %v77, 113
    %v374 = vpop.permute.xlu0 %373
    %375 = vrot.lane.b32.xlu0 %v79, 113
    %v376 = vpop.permute.xlu0 %375
    %vm377 = vcmp.lt.s32.totalorder %v97, 113
    %v378 = vsel %vm377, %v370, %v374
    %v379 = vsel %vm377, %v372, %v376
    %v380 = vsel %vm377, %v366, %v370
    %v381 = vsel %vm377, %v368, %v372
    %v382 = vsel %vm377, %v362, %v366
    %v383 = vsel %vm377, %v364, %v368
    %v384 = vsel %vm377, %v374, %v362
    %v385 = vsel %vm377, %v376, %v364
    %s386 = scalar_lea.vmem [#allocation7], 6
    %v387 = vld [vmem:[%s386] ss:$8 sm:$0xf]
    %v389 = vlaneseq
    %v390 = vshrl.u32 %v389, 7
    %v391 = vsub.s32 0, %v390
    %v392 = vrot.slane %v387, %v391
    %v393 = vlaneseq
    %v394 = vshrl.u32 %v393, 7
    %v395 = vsub.s32 1, %v394
    %v396 = vrot.slane %v387, %v395
    %v397 = vlaneseq
    %v398 = vshrl.u32 %v397, 7
    %v399 = vsub.s32 2, %v398
    %v400 = vrot.slane %v387, %v399
    %v401 = vlaneseq
    %v402 = vshrl.u32 %v401, 7
    %v403 = vsub.s32 3, %v402
    %v404 = vrot.slane %v387, %v403
    %v409 = vmul.f32 %v382, %v392
    %v410 = vmul.f32 %v380, %v396
    %v411 = vmul.f32 %v378, %v400
    %v412 = vmul.f32 %v384, %v404
    %v413 = vmul.f32 %v383, %v392
    %v414 = vmul.f32 %v381, %v396
    %v415 = vmul.f32 %v379, %v400
    %v416 = vmul.f32 %v385, %v404
    %417 = vrot.lane.b32.xlu0 %v71, 112
    %v418 = vpop.permute.xlu0 %417
    %419 = vrot.lane.b32.xlu0 %v73, 112
    %v420 = vpop.permute.xlu0 %419
    %421 = vrot.lane.b32.xlu0 %v72, 112
    %v422 = vpop.permute.xlu0 %421
    %423 = vrot.lane.b32.xlu0 %v74, 112
    %v424 = vpop.permute.xlu0 %423
    %425 = vrot.lane.b32.xlu0 %v76, 112
    %v426 = vpop.permute.xlu0 %425
    %427 = vrot.lane.b32.xlu0 %v78, 112
    %v428 = vpop.permute.xlu0 %427
    %429 = vrot.lane.b32.xlu0 %v77, 112
    %v430 = vpop.permute.xlu0 %429
    %431 = vrot.lane.b32.xlu0 %v79, 112
    %v432 = vpop.permute.xlu0 %431
    %vm433 = vcmp.lt.s32.totalorder %v97, 112
    %v434 = vsel %vm433, %v426, %v430
    %v435 = vsel %vm433, %v428, %v432
    %v436 = vsel %vm433, %v422, %v426
    %v437 = vsel %vm433, %v424, %v428
    %v438 = vsel %vm433, %v418, %v422
    %v439 = vsel %vm433, %v420, %v424
    %v440 = vsel %vm433, %v430, %v418
    %v441 = vsel %vm433, %v432, %v420
    %s442 = scalar_lea.vmem [#allocation7], 7
    %v443 = vld [vmem:[%s442] ss:$8 sm:$0xf]
    %v445 = vlaneseq
    %v446 = vshrl.u32 %v445, 7
    %v447 = vsub.s32 0, %v446
    %v448 = vrot.slane %v443, %v447
    %v449 = vlaneseq
    %v450 = vshrl.u32 %v449, 7
    %v451 = vsub.s32 1, %v450
    %v452 = vrot.slane %v443, %v451
    %v453 = vlaneseq
    %v454 = vshrl.u32 %v453, 7
    %v455 = vsub.s32 2, %v454
    %v456 = vrot.slane %v443, %v455
    %v457 = vlaneseq
    %v458 = vshrl.u32 %v457, 7
    %v459 = vsub.s32 3, %v458
    %v460 = vrot.slane %v443, %v459
    %v465 = vmul.f32 %v438, %v448
    %v466 = vmul.f32 %v436, %v452
    %v467 = vmul.f32 %v434, %v456
    %v468 = vmul.f32 %v440, %v460
    %v469 = vmul.f32 %v439, %v448
    %v470 = vmul.f32 %v437, %v452
    %v471 = vmul.f32 %v435, %v456
    %v472 = vmul.f32 %v441, %v460
    %473 = vrot.lane.b32.xlu0 %v71, 111
    %v474 = vpop.permute.xlu0 %473
    %475 = vrot.lane.b32.xlu0 %v73, 111
    %v476 = vpop.permute.xlu0 %475
    %477 = vrot.lane.b32.xlu0 %v72, 111
    %v478 = vpop.permute.xlu0 %477
    %479 = vrot.lane.b32.xlu0 %v74, 111
    %v480 = vpop.permute.xlu0 %479
    %481 = vrot.lane.b32.xlu0 %v76, 111
    %v482 = vpop.permute.xlu0 %481
    %483 = vrot.lane.b32.xlu0 %v78, 111
    %v484 = vpop.permute.xlu0 %483
    %485 = vrot.lane.b32.xlu0 %v77, 111
    %v486 = vpop.permute.xlu0 %485
    %487 = vrot.lane.b32.xlu0 %v79, 111
    %v488 = vpop.permute.xlu0 %487
    %vm489 = vcmp.lt.s32.totalorder %v97, 111
    %v490 = vsel %vm489, %v482, %v486
    %v491 = vsel %vm489, %v484, %v488
    %v492 = vsel %vm489, %v478, %v482
    %v493 = vsel %vm489, %v480, %v484
    %v494 = vsel %vm489, %v474, %v478
    %v495 = vsel %vm489, %v476, %v480
    %v496 = vsel %vm489, %v486, %v474
    %v497 = vsel %vm489, %v488, %v476
    %s498 = scalar_lea.vmem [#allocation7], 32
    %v499 = vld [vmem:[%s498] ss:$8 sm:$0xf]
    %v501 = vlaneseq
    %v502 = vshrl.u32 %v501, 7
    %v503 = vsub.s32 0, %v502
    %v504 = vrot.slane %v499, %v503
    %v505 = vlaneseq
    %v506 = vshrl.u32 %v505, 7
    %v507 = vsub.s32 1, %v506
    %v508 = vrot.slane %v499, %v507
    %v509 = vlaneseq
    %v510 = vshrl.u32 %v509, 7
    %v511 = vsub.s32 2, %v510
    %v512 = vrot.slane %v499, %v511
    %v513 = vlaneseq
    %v514 = vshrl.u32 %v513, 7
    %v515 = vsub.s32 3, %v514
    %v516 = vrot.slane %v499, %v515
    %v521 = vmul.f32 %v494, %v504
    %v522 = vmul.f32 %v492, %v508
    %v523 = vmul.f32 %v490, %v512
    %v524 = vmul.f32 %v496, %v516
    %v525 = vmul.f32 %v495, %v504
    %v526 = vmul.f32 %v493, %v508
    %v527 = vmul.f32 %v491, %v512
    %v528 = vmul.f32 %v497, %v516
    %v529 = vld [vmem:[#allocation2] sm:$0xff]
    %v530 = vld [vmem:[#allocation2 + $0x8] sm:$0xff]
    %v531 = vld [vmem:[#allocation2 + $0x10] sm:$0xff]
    %v532 = vld [vmem:[#allocation2 + $0x18] sm:$0xff]
    %vm533 = vcmask 130048
    %v535 = vsel %vm533, %v530, 0
    %v538 = vsel %vm533, %v532, 0
    %540 = vmatprep.subr.mxu0 %v130
    %541 = vmatpush1.msra.mxu0 %v129
    %542 = vmatprep.subr.mxu0 %v134
    %543 = vmatpush1.msra.mxu0 %v133
    %544 = vmatprep.subr.mxu0 %v186
    %545 = vmatpush1.msra.mxu0 %v185
    %546 = vmatprep.subr.mxu0 %v190
    %547 = vmatpush1.msra.mxu0 %v189
    %548 = vmatprep.subr.mxu0 %v242
    %549 = vmatpush1.msra.mxu0 %v241
    %550 = vmatprep.subr.mxu0 %v246
    %551 = vmatpush1.msra.mxu0 %v245
    %552 = vmatprep.subr.mxu0 %v298
    %553 = vmatpush1.msra.mxu0 %v297
    %554 = vmatprep.subr.mxu0 %v302
    %555 = vmatpush1.msra.mxu0 %v301
    %556 = vmatprep.subr.mxu0 %v72
    %557 = vmatpush1.msra.mxu0 %v71
    %558 = vmatprep.subr.mxu0 %v74
    %559 = vmatpush1.msra.mxu0 %v73
    %560 = vmatprep.subr.mxu0 %v354
    %561 = vmatpush1.msra.mxu0 %v353
    %562 = vmatprep.subr.mxu0 %v358
    %563 = vmatpush1.msra.mxu0 %v357
    %564 = vmatprep.subr.mxu0 %v410
    %565 = vmatpush1.msra.mxu0 %v409
    %566 = vmatprep.subr.mxu0 %v414
    %567 = vmatpush1.msra.mxu0 %v413
    %568 = vmatprep.subr.mxu0 %v466
    %569 = vmatpush1.msra.mxu0 %v465
    %570 = vmatprep.subr.mxu0 %v470
    %571 = vmatpush1.msra.mxu0 %v469
    %572 = vmatprep.subr.mxu0 %v522
    %573 = vmatpush1.msra.mxu0 %v521
    %574 = vmatprep.subr.mxu0 %v526
    %575 = vmatpush1.msra.mxu0 %v525
    %576 = vmatprep.subr.mxu0 0.0
    %577 = vmatpush1.msra.mxu0 0.0
    %578 = vmatprep.subr.mxu0 0.0
    %579 = vmatpush1.msra.mxu0 0.0
    %580 = vmatprep.subr.mxu0 0.0
    %581 = vmatpush1.msra.mxu0 0.0
    %582 = vmatprep.subr.mxu0 0.0
    %583 = vmatpush1.msra.mxu0 0.0
    %584 = vmatprep.subr.mxu0 0.0
    %585 = vmatpush1.msra.mxu0 0.0
    %586 = vmatprep.subr.mxu0 0.0
    %587 = vmatpush1.msra.mxu0 0.0
    %588 = vmatprep.subr.mxu0 0.0
    %589 = vmatpush1.msra.mxu0 0.0
    %590 = vmatprep.subr.mxu0 0.0
    %591 = vmatpush1.msra.mxu0 0.0
    %592 = vmatprep.subr.mxu0 0.0
    %593 = vmatpush1.msra.mxu0 0.0
    %594 = vmatprep.subr.mxu0 0.0
    %595 = vmatpush1.msra.mxu0 0.0
    %596 = vmatprep.subr.mxu0 0.0
    %597 = vmatpush1.msra.mxu0 0.0
    %598 = vmatprep.subr.mxu0 0.0
    %599 = vmatpush1.msra.mxu0 0.0
    %600 = vmatprep.subr.mxu0 0.0
    %601 = vmatpush1.msra.mxu0 0.0
    %602 = vmatprep.subr.mxu0 0.0
    %603 = vmatpush1.msra.mxu0 0.0
    %604 = vmatprep.mubr.f32.mxu0 %v535
    %605 = vmatmul.mubr.f32.gmra.mrb[0].mxu0 %v529
    %v606 = vpop.f32.mrb[0].mxu0
    %v607 = vadd.f32 0.0, %v606
    %v608 = vpop.f32.mrb[0].mxu0
    %v609 = vadd.f32 0.0, %v608
    %610 = vmatprep.mubr.f32.mxu0 %v538
    %611 = vmatmul.mubr.f32.gmra.mrb[0].mxu0 %v531
    %v612 = vpop.f32.mrb[0].mxu0
    %v613 = vadd.f32 0.0, %v612
    %v614 = vpop.f32.mrb[0].mxu0
    %v615 = vadd.f32 0.0, %v614
    %616 = vdwg.mxu0
    %617 = vmatprep.subr.mxu0 %v132
    %618 = vmatpush1.msra.mxu0 %v131
    %619 = vmatprep.subr.mxu0 %v136
    %620 = vmatpush1.msra.mxu0 %v135
    %621 = vmatprep.subr.mxu0 %v188
    %622 = vmatpush1.msra.mxu0 %v187
    %623 = vmatprep.subr.mxu0 %v192
    %624 = vmatpush1.msra.mxu0 %v191
    %625 = vmatprep.subr.mxu0 %v244
    %626 = vmatpush1.msra.mxu0 %v243
    %627 = vmatprep.subr.mxu0 %v248
    %628 = vmatpush1.msra.mxu0 %v247
    %629 = vmatprep.subr.mxu0 %v300
    %630 = vmatpush1.msra.mxu0 %v299
    %631 = vmatprep.subr.mxu0 %v304
    %632 = vmatpush1.msra.mxu0 %v303
    %633 = vmatprep.subr.mxu0 %v77
    %634 = vmatpush1.msra.mxu0 %v76
    %635 = vmatprep.subr.mxu0 %v79
    %636 = vmatpush1.msra.mxu0 %v78
    %637 = vmatprep.subr.mxu0 %v356
    %638 = vmatpush1.msra.mxu0 %v355
    %639 = vmatprep.subr.mxu0 %v360
    %640 = vmatpush1.msra.mxu0 %v359
    %641 = vmatprep.subr.mxu0 %v412
    %642 = vmatpush1.msra.mxu0 %v411
    %643 = vmatprep.subr.mxu0 %v416
    %644 = vmatpush1.msra.mxu0 %v415
    %645 = vmatprep.subr.mxu0 %v468
    %646 = vmatpush1.msra.mxu0 %v467
    %647 = vmatprep.subr.mxu0 %v472
    %648 = vmatpush1.msra.mxu0 %v471
    %649 = vmatprep.subr.mxu0 %v524
    %650 = vmatpush1.msra.mxu0 %v523
    %651 = vmatprep.subr.mxu0 %v528
    %652 = vmatpush1.msra.mxu0 %v527
    %653 = vmatprep.subr.mxu0 0.0
    %654 = vmatpush1.msra.mxu0 0.0
    %655 = vmatprep.subr.mxu0 0.0
    %656 = vmatpush1.msra.mxu0 0.0
    %657 = vmatprep.subr.mxu0 0.0
    %658 = vmatpush1.msra.mxu0 0.0
    %659 = vmatprep.subr.mxu0 0.0
    %660 = vmatpush1.msra.mxu0 0.0
    %661 = vmatprep.subr.mxu0 0.0
    %662 = vmatpush1.msra.mxu0 0.0
    %663 = vmatprep.subr.mxu0 0.0
    %664 = vmatpush1.msra.mxu0 0.0
    %665 = vmatprep.subr.mxu0 0.0
    %666 = vmatpush1.msra.mxu0 0.0
    %667 = vmatprep.subr.mxu0 0.0
    %668 = vmatpush1.msra.mxu0 0.0
    %669 = vmatprep.subr.mxu0 0.0
    %670 = vmatpush1.msra.mxu0 0.0
    %671 = vmatprep.subr.mxu0 0.0
    %672 = vmatpush1.msra.mxu0 0.0
    %673 = vmatprep.subr.mxu0 0.0
    %674 = vmatpush1.msra.mxu0 0.0
    %675 = vmatprep.subr.mxu0 0.0
    %676 = vmatpush1.msra.mxu0 0.0
    %677 = vmatprep.subr.mxu0 0.0
    %678 = vmatpush1.msra.mxu0 0.0
    %679 = vmatprep.subr.mxu0 0.0
    %680 = vmatpush1.msra.mxu0 0.0
    %681 = vmatprep.mubr.f32.mxu0 %v535
    %682 = vmatmul.mubr.f32.gmra.mrb[0].mxu0 %v529
    %v683 = vpop.f32.mrb[0].mxu0
    %v684 = vadd.f32 0.0, %v683
    %v685 = vpop.f32.mrb[0].mxu0
    %v686 = vadd.f32 0.0, %v685
    %687 = vmatprep.mubr.f32.mxu0 %v538
    %688 = vmatmul.mubr.f32.gmra.mrb[0].mxu0 %v531
    %v689 = vpop.f32.mrb[0].mxu0
    %v690 = vadd.f32 0.0, %v689
    %v691 = vpop.f32.mrb[0].mxu0
    %v692 = vadd.f32 0.0, %v691
    %693 = vdwg.mxu0
    %v694 = vld [vmem:[%s4] sm:$0xff]
    %v695 = vld [vmem:[%s4 + $0x8] sm:$0xff]
    %v696 = vld [vmem:[%s5] sm:$0xff]
    %v697 = vld [vmem:[%s5 + $0x8] sm:$0xff]
    %v698 = vadd.f32 %v607, %v609
    %v699 = vadd.f32 %v698, %v684
    %v700 = vadd.f32 %v699, %v686
    %701 = vadd.xlane.f32.xlu0 %v700
    %v702 = vpop.xlane.xlu0 %701
    %v703 = vadd.f32 %v613, %v615
    %v704 = vadd.f32 %v703, %v690
    %v705 = vadd.f32 %v704, %v692
    %706 = vadd.xlane.f32.xlu0 %v705
    %v707 = vpop.xlane.xlu0 %706
    %v708 = vmul.f32 %v702, 0.001953125
    %v709 = vmul.f32 %v707, 0.001953125
    %v710 = vsub.f32 %v607, %v708
    %v711 = vsub.f32 %v609, %v708
    %v712 = vsub.f32 %v684, %v708
    %v713 = vsub.f32 %v686, %v708
    %v714 = vsub.f32 %v613, %v709
    %v715 = vsub.f32 %v615, %v709
    %v716 = vsub.f32 %v690, %v709
    %v717 = vsub.f32 %v692, %v709
    %v718 = vmul.f32 %v710, %v710
    %v719 = vmul.f32 %v711, %v711
    %v720 = vmul.f32 %v712, %v712
    %v721 = vmul.f32 %v713, %v713
    %v722 = vmul.f32 %v714, %v714
    %v723 = vmul.f32 %v715, %v715
    %v724 = vmul.f32 %v716, %v716
    %v725 = vmul.f32 %v717, %v717
    %v726 = vadd.f32 %v718, %v719
    %v727 = vadd.f32 %v726, %v720
    %v728 = vadd.f32 %v727, %v721
    %729 = vadd.xlane.f32.xlu0 %v728
    %v730 = vpop.xlane.xlu0 %729
    %v731 = vadd.f32 %v722, %v723
    %v732 = vadd.f32 %v731, %v724
    %v733 = vadd.f32 %v732, %v725
    %734 = vadd.xlane.f32.xlu0 %v733
    %v735 = vpop.xlane.xlu0 %734
    %v736 = vmul.f32 %v730, 0.001953125
    %v737 = vmul.f32 %v735, 0.001953125
    %v738 = vadd.f32 %v736, 1e-05
    %v739 = vadd.f32 %v737, 1e-05
    %v740 = vrsqrt.pop %v738
    %v741 = vrsqrt.pop %v739
    %v742 = vmul.f32 %v694, %v740
    %v743 = vmul.f32 %v695, %v741
    %745 = vset.pattern.permute.xlu0 0
    %746 = vperm.xlu0 %745, %v742
    %v747 = vpop.permute.xlu0 %746
    %750 = vset.pattern.permute.xlu0 0
    %751 = vperm.xlu0 %750, %v743
    %v752 = vpop.permute.xlu0 %751
    %v754 = vmul.f32 %v710, %v747
    %v755 = vmul.f32 %v711, %v747
    %v756 = vmul.f32 %v712, %v747
    %v757 = vmul.f32 %v713, %v747
    %v758 = vmul.f32 %v714, %v752
    %v759 = vmul.f32 %v715, %v752
    %v760 = vmul.f32 %v716, %v752
    %v761 = vmul.f32 %v717, %v752
    %763 = vset.pattern.permute.xlu0 0
    %764 = vperm.xlu0 %763, %v696
    %v765 = vpop.permute.xlu0 %764
    %768 = vset.pattern.permute.xlu0 0
    %769 = vperm.xlu0 %768, %v697
    %v770 = vpop.permute.xlu0 %769
    %v772 = vadd.f32 %v754, %v765
    %v773 = vadd.f32 %v755, %v765
    %v774 = vadd.f32 %v756, %v765
    %v775 = vadd.f32 %v757, %v765
    %v776 = vadd.f32 %v758, %v770
    %v777 = vadd.f32 %v759, %v770
    %v778 = vadd.f32 %v760, %v770
    %v779 = vadd.f32 %v761, %v770
    %v780 = vmax.f32 %v772, 0.0
    %v781 = vmax.f32 %v773, 0.0
    %v782 = vmax.f32 %v774, 0.0
    %v783 = vmax.f32 %v775, 0.0
    %v784 = vmax.f32 %v776, 0.0
    %v785 = vmax.f32 %v777, 0.0
    %v786 = vmax.f32 %v778, 0.0
    %v787 = vmax.f32 %v779, 0.0
    %788 = vrot.lane.b32.xlu0 %v780, 17
    %v789 = vpop.permute.xlu0 %788
    %790 = vrot.lane.b32.xlu0 %v784, 17
    %v791 = vpop.permute.xlu0 %790
    %792 = vrot.lane.b32.xlu0 %v781, 17
    %v793 = vpop.permute.xlu0 %792
    %794 = vrot.lane.b32.xlu0 %v785, 17
    %v795 = vpop.permute.xlu0 %794
    %796 = vrot.lane.b32.xlu0 %v782, 17
    %v797 = vpop.permute.xlu0 %796
    %798 = vrot.lane.b32.xlu0 %v786, 17
    %v799 = vpop.permute.xlu0 %798
    %800 = vrot.lane.b32.xlu0 %v783, 17
    %v801 = vpop.permute.xlu0 %800
    %802 = vrot.lane.b32.xlu0 %v787, 17
    %v803 = vpop.permute.xlu0 %802
    %v804 = vsel %vm98, %v797, %v801
    %v805 = vsel %vm98, %v799, %v803
    %v806 = vsel %vm98, %v793, %v797
    %v807 = vsel %vm98, %v795, %v799
    %v808 = vsel %vm98, %v789, %v793
    %v809 = vsel %vm98, %v791, %v795
    %v810 = vsel %vm98, %v801, %v789
    %v811 = vsel %vm98, %v803, %v791
    %v812 = vmul.f32 %v810, %v112
    %v813 = vmul.f32 %v808, %v116
    %v814 = vmul.f32 %v806, %v120
    %v815 = vmul.f32 %v804, %v124
    %v816 = vmul.f32 %v811, %v112
    %v817 = vmul.f32 %v809, %v116
    %v818 = vmul.f32 %v807, %v120
    %v819 = vmul.f32 %v805, %v124
    %820 = vrot.lane.b32.xlu0 %v780, 16
    %v821 = vpop.permute.xlu0 %820
    %822 = vrot.lane.b32.xlu0 %v784, 16
    %v823 = vpop.permute.xlu0 %822
    %824 = vrot.lane.b32.xlu0 %v781, 16
    %v825 = vpop.permute.xlu0 %824
    %826 = vrot.lane.b32.xlu0 %v785, 16
    %v827 = vpop.permute.xlu0 %826
    %828 = vrot.lane.b32.xlu0 %v782, 16
    %v829 = vpop.permute.xlu0 %828
    %830 = vrot.lane.b32.xlu0 %v786, 16
    %v831 = vpop.permute.xlu0 %830
    %832 = vrot.lane.b32.xlu0 %v783, 16
    %v833 = vpop.permute.xlu0 %832
    %834 = vrot.lane.b32.xlu0 %v787, 16
    %v835 = vpop.permute.xlu0 %834
    %v836 = vsel %vm153, %v829, %v833
    %v837 = vsel %vm153, %v831, %v835
    %v838 = vsel %vm153, %v825, %v829
    %v839 = vsel %vm153, %v827, %v831
    %v840 = vsel %vm153, %v821, %v825
    %v841 = vsel %vm153, %v823, %v827
    %v842 = vsel %vm153, %v833, %v821
    %v843 = vsel %vm153, %v835, %v823
    %v844 = vmul.f32 %v842, %v168
    %v845 = vmul.f32 %v840, %v172
    %v846 = vmul.f32 %v838, %v176
    %v847 = vmul.f32 %v836, %v180
    %v848 = vmul.f32 %v843, %v168
    %v849 = vmul.f32 %v841, %v172
    %v850 = vmul.f32 %v839, %v176
    %v851 = vmul.f32 %v837, %v180
    %852 = vrot.lane.b32.xlu0 %v780, 15
    %v853 = vpop.permute.xlu0 %852
    %854 = vrot.lane.b32.xlu0 %v784, 15
    %v855 = vpop.permute.xlu0 %854
    %856 = vrot.lane.b32.xlu0 %v781, 15
    %v857 = vpop.permute.xlu0 %856
    %858 = vrot.lane.b32.xlu0 %v785, 15
    %v859 = vpop.permute.xlu0 %858
    %860 = vrot.lane.b32.xlu0 %v782, 15
    %v861 = vpop.permute.xlu0 %860
    %862 = vrot.lane.b32.xlu0 %v786, 15
    %v863 = vpop.permute.xlu0 %862
    %864 = vrot.lane.b32.xlu0 %v783, 15
    %v865 = vpop.permute.xlu0 %864
    %866 = vrot.lane.b32.xlu0 %v787, 15
    %v867 = vpop.permute.xlu0 %866
    %v868 = vsel %vm209, %v861, %v865
    %v869 = vsel %vm209, %v863, %v867
    %v870 = vsel %vm209, %v857, %v861
    %v871 = vsel %vm209, %v859, %v863
    %v872 = vsel %vm209, %v853, %v857
    %v873 = vsel %vm209, %v855, %v859
    %v874 = vsel %vm209, %v865, %v853
    %v875 = vsel %vm209, %v867, %v855
    %v876 = vmul.f32 %v874, %v224
    %v877 = vmul.f32 %v872, %v228
    %v878 = vmul.f32 %v870, %v232
    %v879 = vmul.f32 %v868, %v236
    %v880 = vmul.f32 %v875, %v224
    %v881 = vmul.f32 %v873, %v228
    %v882 = vmul.f32 %v871, %v232
    %v883 = vmul.f32 %v869, %v236
    %884 = vrot.lane.b32.xlu0 %v780, 1
    %v885 = vpop.permute.xlu0 %884
    %886 = vrot.lane.b32.xlu0 %v784, 1
    %v887 = vpop.permute.xlu0 %886
    %888 = vrot.lane.b32.xlu0 %v781, 1
    %v889 = vpop.permute.xlu0 %888
    %890 = vrot.lane.b32.xlu0 %v785, 1
    %v891 = vpop.permute.xlu0 %890
    %892 = vrot.lane.b32.xlu0 %v782, 1
    %v893 = vpop.permute.xlu0 %892
    %894 = vrot.lane.b32.xlu0 %v786, 1
    %v895 = vpop.permute.xlu0 %894
    %896 = vrot.lane.b32.xlu0 %v783, 1
    %v897 = vpop.permute.xlu0 %896
    %898 = vrot.lane.b32.xlu0 %v787, 1
    %v899 = vpop.permute.xlu0 %898
    %v900 = vsel %vm265, %v893, %v897
    %v901 = vsel %vm265, %v895, %v899
    %v902 = vsel %vm265, %v889, %v893
    %v903 = vsel %vm265, %v891, %v895
    %v904 = vsel %vm265, %v885, %v889
    %v905 = vsel %vm265, %v887, %v891
    %v906 = vsel %vm265, %v897, %v885
    %v907 = vsel %vm265, %v899, %v887
    %v908 = vmul.f32 %v906, %v280
    %v909 = vmul.f32 %v904, %v284
    %v910 = vmul.f32 %v902, %v288
    %v911 = vmul.f32 %v900, %v292
    %v912 = vmul.f32 %v907, %v280
    %v913 = vmul.f32 %v905, %v284
    %v914 = vmul.f32 %v903, %v288
    %v915 = vmul.f32 %v901, %v292
    %916 = vrot.lane.b32.xlu0 %v780, 127
    %v917 = vpop.permute.xlu0 %916
    %918 = vrot.lane.b32.xlu0 %v784, 127
    %v919 = vpop.permute.xlu0 %918
    %920 = vrot.lane.b32.xlu0 %v781, 127
    %v921 = vpop.permute.xlu0 %920
    %922 = vrot.lane.b32.xlu0 %v785, 127
    %v923 = vpop.permute.xlu0 %922
    %924 = vrot.lane.b32.xlu0 %v782, 127
    %v925 = vpop.permute.xlu0 %924
    %926 = vrot.lane.b32.xlu0 %v786, 127
    %v927 = vpop.permute.xlu0 %926
    %928 = vrot.lane.b32.xlu0 %v783, 127
    %v929 = vpop.permute.xlu0 %928
    %930 = vrot.lane.b32.xlu0 %v787, 127
    %v931 = vpop.permute.xlu0 %930
    %v932 = vsel %vm321, %v925, %v929
    %v933 = vsel %vm321, %v927, %v931
    %v934 = vsel %vm321, %v921, %v925
    %v935 = vsel %vm321, %v923, %v927
    %v936 = vsel %vm321, %v917, %v921
    %v937 = vsel %vm321, %v919, %v923
    %v938 = vsel %vm321, %v929, %v917
    %v939 = vsel %vm321, %v931, %v919
    %v940 = vmul.f32 %v936, %v336
    %v941 = vmul.f32 %v934, %v340
    %v942 = vmul.f32 %v932, %v344
    %v943 = vmul.f32 %v938, %v348
    %v944 = vmul.f32 %v937, %v336
    %v945 = vmul.f32 %v935, %v340
    %v946 = vmul.f32 %v933, %v344
    %v947 = vmul.f32 %v939, %v348
    %948 = vrot.lane.b32.xlu0 %v780, 113
    %v949 = vpop.permute.xlu0 %948
    %950 = vrot.lane.b32.xlu0 %v784, 113
    %v951 = vpop.permute.xlu0 %950
    %952 = vrot.lane.b32.xlu0 %v781, 113
    %v953 = vpop.permute.xlu0 %952
    %954 = vrot.lane.b32.xlu0 %v785, 113
    %v955 = vpop.permute.xlu0 %954
    %956 = vrot.lane.b32.xlu0 %v782, 113
    %v957 = vpop.permute.xlu0 %956
    %958 = vrot.lane.b32.xlu0 %v786, 113
    %v959 = vpop.permute.xlu0 %958
    %960 = vrot.lane.b32.xlu0 %v783, 113
    %v961 = vpop.permute.xlu0 %960
    %962 = vrot.lane.b32.xlu0 %v787, 113
    %v963 = vpop.permute.xlu0 %962
    %v964 = vsel %vm377, %v957, %v961
    %v965 = vsel %vm377, %v959, %v963
    %v966 = vsel %vm377, %v953, %v957
    %v967 = vsel %vm377, %v955, %v959
    %v968 = vsel %vm377, %v949, %v953
    %v969 = vsel %vm377, %v951, %v955
    %v970 = vsel %vm377, %v961, %v949
    %v971 = vsel %vm377, %v963, %v951
    %v972 = vmul.f32 %v968, %v392
    %v973 = vmul.f32 %v966, %v396
    %v974 = vmul.f32 %v964, %v400
    %v975 = vmul.f32 %v970, %v404
    %v976 = vmul.f32 %v969, %v392
    %v977 = vmul.f32 %v967, %v396
    %v978 = vmul.f32 %v965, %v400
    %v979 = vmul.f32 %v971, %v404
    %980 = vrot.lane.b32.xlu0 %v780, 112
    %v981 = vpop.permute.xlu0 %980
    %982 = vrot.lane.b32.xlu0 %v784, 112
    %v983 = vpop.permute.xlu0 %982
    %984 = vrot.lane.b32.xlu0 %v781, 112
    %v985 = vpop.permute.xlu0 %984
    %986 = vrot.lane.b32.xlu0 %v785, 112
    %v987 = vpop.permute.xlu0 %986
    %988 = vrot.lane.b32.xlu0 %v782, 112
    %v989 = vpop.permute.xlu0 %988
    %990 = vrot.lane.b32.xlu0 %v786, 112
    %v991 = vpop.permute.xlu0 %990
    %992 = vrot.lane.b32.xlu0 %v783, 112
    %v993 = vpop.permute.xlu0 %992
    %994 = vrot.lane.b32.xlu0 %v787, 112
    %v995 = vpop.permute.xlu0 %994
    %v996 = vsel %vm433, %v989, %v993
    %v997 = vsel %vm433, %v991, %v995
    %v998 = vsel %vm433, %v985, %v989
    %v999 = vsel %vm433, %v987, %v991
    %v1000 = vsel %vm433, %v981, %v985
    %v1001 = vsel %vm433, %v983, %v987
    %v1002 = vsel %vm433, %v993, %v981
    %v1003 = vsel %vm433, %v995, %v983
    %v1004 = vmul.f32 %v1000, %v448
    %v1005 = vmul.f32 %v998, %v452
    %v1006 = vmul.f32 %v996, %v456
    %v1007 = vmul.f32 %v1002, %v460
    %v1008 = vmul.f32 %v1001, %v448
    %v1009 = vmul.f32 %v999, %v452
    %v1010 = vmul.f32 %v997, %v456
    %v1011 = vmul.f32 %v1003, %v460
    %1012 = vrot.lane.b32.xlu0 %v780, 111
    %v1013 = vpop.permute.xlu0 %1012
    %1014 = vrot.lane.b32.xlu0 %v784, 111
    %v1015 = vpop.permute.xlu0 %1014
    %1016 = vrot.lane.b32.xlu0 %v781, 111
    %v1017 = vpop.permute.xlu0 %1016
    %1018 = vrot.lane.b32.xlu0 %v785, 111
    %v1019 = vpop.permute.xlu0 %1018
    %1020 = vrot.lane.b32.xlu0 %v782, 111
    %v1021 = vpop.permute.xlu0 %1020
    %1022 = vrot.lane.b32.xlu0 %v786, 111
    %v1023 = vpop.permute.xlu0 %1022
    %1024 = vrot.lane.b32.xlu0 %v783, 111
    %v1025 = vpop.permute.xlu0 %1024
    %1026 = vrot.lane.b32.xlu0 %v787, 111
    %v1027 = vpop.permute.xlu0 %1026
    %v1028 = vsel %vm489, %v1021, %v1025
    %v1029 = vsel %vm489, %v1023, %v1027
    %v1030 = vsel %vm489, %v1017, %v1021
    %v1031 = vsel %vm489, %v1019, %v1023
    %v1032 = vsel %vm489, %v1013, %v1017
    %v1033 = vsel %vm489, %v1015, %v1019
    %v1034 = vsel %vm489, %v1025, %v1013
    %v1035 = vsel %vm489, %v1027, %v1015
    %v1036 = vmul.f32 %v1032, %v504
    %v1037 = vmul.f32 %v1030, %v508
    %v1038 = vmul.f32 %v1028, %v512
    %v1039 = vmul.f32 %v1034, %v516
    %v1040 = vmul.f32 %v1033, %v504
    %v1041 = vmul.f32 %v1031, %v508
    %v1042 = vmul.f32 %v1029, %v512
    %v1043 = vmul.f32 %v1035, %v516
    %v1044 = vld [vmem:[#allocation5] sm:$0xff]
    %v1045 = vld [vmem:[#allocation5 + $0x8] sm:$0xff]
    %v1046 = vld [vmem:[#allocation5 + $0x10] sm:$0xff]
    %v1047 = vld [vmem:[#allocation5 + $0x18] sm:$0xff]
    %v1049 = vsel %vm533, %v1045, 0
    %v1052 = vsel %vm533, %v1047, 0
    %1054 = vmatprep.subr.mxu0 %v813
    %1055 = vmatpush1.msra.mxu0 %v812
    %1056 = vmatprep.subr.mxu0 %v817
    %1057 = vmatpush1.msra.mxu0 %v816
    %1058 = vmatprep.subr.mxu0 %v845
    %1059 = vmatpush1.msra.mxu0 %v844
    %1060 = vmatprep.subr.mxu0 %v849
    %1061 = vmatpush1.msra.mxu0 %v848
    %1062 = vmatprep.subr.mxu0 %v877
    %1063 = vmatpush1.msra.mxu0 %v876
    %1064 = vmatprep.subr.mxu0 %v881
    %1065 = vmatpush1.msra.mxu0 %v880
    %1066 = vmatprep.subr.mxu0 %v909
    %1067 = vmatpush1.msra.mxu0 %v908
    %1068 = vmatprep.subr.mxu0 %v913
    %1069 = vmatpush1.msra.mxu0 %v912
    %1070 = vmatprep.subr.mxu0 %v781
    %1071 = vmatpush1.msra.mxu0 %v780
    %1072 = vmatprep.subr.mxu0 %v785
    %1073 = vmatpush1.msra.mxu0 %v784
    %1074 = vmatprep.subr.mxu0 %v941
    %1075 = vmatpush1.msra.mxu0 %v940
    %1076 = vmatprep.subr.mxu0 %v945
    %1077 = vmatpush1.msra.mxu0 %v944
    %1078 = vmatprep.subr.mxu0 %v973
    %1079 = vmatpush1.msra.mxu0 %v972
    %1080 = vmatprep.subr.mxu0 %v977
    %1081 = vmatpush1.msra.mxu0 %v976
    %1082 = vmatprep.subr.mxu0 %v1005
    %1083 = vmatpush1.msra.mxu0 %v1004
    %1084 = vmatprep.subr.mxu0 %v1009
    %1085 = vmatpush1.msra.mxu0 %v1008
    %1086 = vmatprep.subr.mxu0 %v1037
    %1087 = vmatpush1.msra.mxu0 %v1036
    %1088 = vmatprep.subr.mxu0 %v1041
    %1089 = vmatpush1.msra.mxu0 %v1040
    %1090 = vmatprep.subr.mxu0 0.0
    %1091 = vmatpush1.msra.mxu0 0.0
    %1092 = vmatprep.subr.mxu0 0.0
    %1093 = vmatpush1.msra.mxu0 0.0
    %1094 = vmatprep.subr.mxu0 0.0
    %1095 = vmatpush1.msra.mxu0 0.0
    %1096 = vmatprep.subr.mxu0 0.0
    %1097 = vmatpush1.msra.mxu0 0.0
    %1098 = vmatprep.subr.mxu0 0.0
    %1099 = vmatpush1.msra.mxu0 0.0
    %1100 = vmatprep.subr.mxu0 0.0
    %1101 = vmatpush1.msra.mxu0 0.0
    %1102 = vmatprep.subr.mxu0 0.0
    %1103 = vmatpush1.msra.mxu0 0.0
    %1104 = vmatprep.subr.mxu0 0.0
    %1105 = vmatpush1.msra.mxu0 0.0
    %1106 = vmatprep.subr.mxu0 0.0
    %1107 = vmatpush1.msra.mxu0 0.0
    %1108 = vmatprep.subr.mxu0 0.0
    %1109 = vmatpush1.msra.mxu0 0.0
    %1110 = vmatprep.subr.mxu0 0.0
    %1111 = vmatpush1.msra.mxu0 0.0
    %1112 = vmatprep.subr.mxu0 0.0
    %1113 = vmatpush1.msra.mxu0 0.0
    %1114 = vmatprep.subr.mxu0 0.0
    %1115 = vmatpush1.msra.mxu0 0.0
    %1116 = vmatprep.subr.mxu0 0.0
    %1117 = vmatpush1.msra.mxu0 0.0
    %1118 = vmatprep.mubr.f32.mxu0 %v1049
    %1119 = vmatmul.mubr.f32.gmra.mrb[0].mxu0 %v1044
    %v1120 = vpop.f32.mrb[0].mxu0
    %v1121 = vadd.f32 0.0, %v1120
    %v1122 = vpop.f32.mrb[0].mxu0
    %v1123 = vadd.f32 0.0, %v1122
    %1124 = vmatprep.mubr.f32.mxu0 %v1052
    %1125 = vmatmul.mubr.f32.gmra.mrb[0].mxu0 %v1046
    %v1126 = vpop.f32.mrb[0].mxu0
    %v1127 = vadd.f32 0.0, %v1126
    %v1128 = vpop.f32.mrb[0].mxu0
    %v1129 = vadd.f32 0.0, %v1128
    %1130 = vdwg.mxu0
    %1131 = vmatprep.subr.mxu0 %v815
    %1132 = vmatpush1.msra.mxu0 %v814
    %1133 = vmatprep.subr.mxu0 %v819
    %1134 = vmatpush1.msra.mxu0 %v818
    %1135 = vmatprep.subr.mxu0 %v847
    %1136 = vmatpush1.msra.mxu0 %v846
    %1137 = vmatprep.subr.mxu0 %v851
    %1138 = vmatpush1.msra.mxu0 %v850
    %1139 = vmatprep.subr.mxu0 %v879
    %1140 = vmatpush1.msra.mxu0 %v878
    %1141 = vmatprep.subr.mxu0 %v883
    %1142 = vmatpush1.msra.mxu0 %v882
    %1143 = vmatprep.subr.mxu0 %v911
    %1144 = vmatpush1.msra.mxu0 %v910
    %1145 = vmatprep.subr.mxu0 %v915
    %1146 = vmatpush1.msra.mxu0 %v914
    %1147 = vmatprep.subr.mxu0 %v783
    %1148 = vmatpush1.msra.mxu0 %v782
    %1149 = vmatprep.subr.mxu0 %v787
    %1150 = vmatpush1.msra.mxu0 %v786
    %1151 = vmatprep.subr.mxu0 %v943
    %1152 = vmatpush1.msra.mxu0 %v942
    %1153 = vmatprep.subr.mxu0 %v947
    %1154 = vmatpush1.msra.mxu0 %v946
    %1155 = vmatprep.subr.mxu0 %v975
    %1156 = vmatpush1.msra.mxu0 %v974
    %1157 = vmatprep.subr.mxu0 %v979
    %1158 = vmatpush1.msra.mxu0 %v978
    %1159 = vmatprep.subr.mxu0 %v1007
    %1160 = vmatpush1.msra.mxu0 %v1006
    %1161 = vmatprep.subr.mxu0 %v1011
    %1162 = vmatpush1.msra.mxu0 %v1010
    %1163 = vmatprep.subr.mxu0 %v1039
    %1164 = vmatpush1.msra.mxu0 %v1038
    %1165 = vmatprep.subr.mxu0 %v1043
    %1166 = vmatpush1.msra.mxu0 %v1042
    %1167 = vmatprep.subr.mxu0 0.0
    %1168 = vmatpush1.msra.mxu0 0.0
    %1169 = vmatprep.subr.mxu0 0.0
    %1170 = vmatpush1.msra.mxu0 0.0
    %1171 = vmatprep.subr.mxu0 0.0
    %1172 = vmatpush1.msra.mxu0 0.0
    %1173 = vmatprep.subr.mxu0 0.0
    %1174 = vmatpush1.msra.mxu0 0.0
    %1175 = vmatprep.subr.mxu0 0.0
    %1176 = vmatpush1.msra.mxu0 0.0
    %1177 = vmatprep.subr.mxu0 0.0
    %1178 = vmatpush1.msra.mxu0 0.0
    %1179 = vmatprep.subr.mxu0 0.0
    %1180 = vmatpush1.msra.mxu0 0.0
    %1181 = vmatprep.subr.mxu0 0.0
    %1182 = vmatpush1.msra.mxu0 0.0
    %1183 = vmatprep.subr.mxu0 0.0
    %1184 = vmatpush1.msra.mxu0 0.0
    %1185 = vmatprep.subr.mxu0 0.0
    %1186 = vmatpush1.msra.mxu0 0.0
    %1187 = vmatprep.subr.mxu0 0.0
    %1188 = vmatpush1.msra.mxu0 0.0
    %1189 = vmatprep.subr.mxu0 0.0
    %1190 = vmatpush1.msra.mxu0 0.0
    %1191 = vmatprep.subr.mxu0 0.0
    %1192 = vmatpush1.msra.mxu0 0.0
    %1193 = vmatprep.subr.mxu0 0.0
    %1194 = vmatpush1.msra.mxu0 0.0
    %1195 = vmatprep.mubr.f32.mxu0 %v1049
    %1196 = vmatmul.mubr.f32.gmra.mrb[0].mxu0 %v1044
    %v1197 = vpop.f32.mrb[0].mxu0
    %v1198 = vadd.f32 0.0, %v1197
    %v1199 = vpop.f32.mrb[0].mxu0
    %v1200 = vadd.f32 0.0, %v1199
    %1201 = vmatprep.mubr.f32.mxu0 %v1052
    %1202 = vmatmul.mubr.f32.gmra.mrb[0].mxu0 %v1046
    %v1203 = vpop.f32.mrb[0].mxu0
    %v1204 = vadd.f32 0.0, %v1203
    %v1205 = vpop.f32.mrb[0].mxu0
    %v1206 = vadd.f32 0.0, %v1205
    %1207 = vdwg.mxu0
    %v1208 = vld [vmem:[%s6] sm:$0xff]
    %v1209 = vld [vmem:[%s6 + $0x8] sm:$0xff]
    %v1210 = vld [vmem:[%s7] sm:$0xff]
    %v1211 = vld [vmem:[%s7 + $0x8] sm:$0xff]
    %v1212 = vadd.f32 %v1121, %v1123
    %v1213 = vadd.f32 %v1212, %v1198
    %v1214 = vadd.f32 %v1213, %v1200
    %1215 = vadd.xlane.f32.xlu0 %v1214
    %v1216 = vpop.xlane.xlu0 %1215
    %v1217 = vadd.f32 %v1127, %v1129
    %v1218 = vadd.f32 %v1217, %v1204
    %v1219 = vadd.f32 %v1218, %v1206
    %1220 = vadd.xlane.f32.xlu0 %v1219
    %v1221 = vpop.xlane.xlu0 %1220
    %v1222 = vmul.f32 %v1216, 0.001953125
    %v1223 = vmul.f32 %v1221, 0.001953125
    %v1224 = vsub.f32 %v1121, %v1222
    %v1225 = vsub.f32 %v1123, %v1222
    %v1226 = vsub.f32 %v1198, %v1222
    %v1227 = vsub.f32 %v1200, %v1222
    %v1228 = vsub.f32 %v1127, %v1223
    %v1229 = vsub.f32 %v1129, %v1223
    %v1230 = vsub.f32 %v1204, %v1223
    %v1231 = vsub.f32 %v1206, %v1223
    %v1232 = vmul.f32 %v1224, %v1224
    %v1233 = vmul.f32 %v1225, %v1225
    %v1234 = vmul.f32 %v1226, %v1226
    %v1235 = vmul.f32 %v1227, %v1227
    %v1236 = vmul.f32 %v1228, %v1228
    %v1237 = vmul.f32 %v1229, %v1229
    %v1238 = vmul.f32 %v1230, %v1230
    %v1239 = vmul.f32 %v1231, %v1231
    %v1240 = vadd.f32 %v1232, %v1233
    %v1241 = vadd.f32 %v1240, %v1234
    %v1242 = vadd.f32 %v1241, %v1235
    %1243 = vadd.xlane.f32.xlu0 %v1242
    %v1244 = vpop.xlane.xlu0 %1243
    %v1245 = vadd.f32 %v1236, %v1237
    %v1246 = vadd.f32 %v1245, %v1238
    %v1247 = vadd.f32 %v1246, %v1239
    %1248 = vadd.xlane.f32.xlu0 %v1247
    %v1249 = vpop.xlane.xlu0 %1248
    %v1250 = vmul.f32 %v1244, 0.001953125
    %v1251 = vmul.f32 %v1249, 0.001953125
    %v1252 = vadd.f32 %v1250, 1e-05
    %v1253 = vadd.f32 %v1251, 1e-05
    %v1254 = vrsqrt.pop %v1252
    %v1255 = vrsqrt.pop %v1253
    %v1256 = vmul.f32 %v1208, %v1254
    %v1257 = vmul.f32 %v1209, %v1255
    %1259 = vset.pattern.permute.xlu0 0
    %1260 = vperm.xlu0 %1259, %v1256
    %v1261 = vpop.permute.xlu0 %1260
    %1264 = vset.pattern.permute.xlu0 0
    %1265 = vperm.xlu0 %1264, %v1257
    %v1266 = vpop.permute.xlu0 %1265
    %v1268 = vmul.f32 %v1224, %v1261
    %v1269 = vmul.f32 %v1225, %v1261
    %v1270 = vmul.f32 %v1226, %v1261
    %v1271 = vmul.f32 %v1227, %v1261
    %v1272 = vmul.f32 %v1228, %v1266
    %v1273 = vmul.f32 %v1229, %v1266
    %v1274 = vmul.f32 %v1230, %v1266
    %v1275 = vmul.f32 %v1231, %v1266
    %1277 = vset.pattern.permute.xlu0 0
    %1278 = vperm.xlu0 %1277, %v1210
    %v1279 = vpop.permute.xlu0 %1278
    %1282 = vset.pattern.permute.xlu0 0
    %1283 = vperm.xlu0 %1282, %v1211
    %v1284 = vpop.permute.xlu0 %1283
    %v1286 = vadd.f32 %v1268, %v1279
    %v1287 = vadd.f32 %v1269, %v1279
    %v1288 = vadd.f32 %v1270, %v1279
    %v1289 = vadd.f32 %v1271, %v1279
    %v1290 = vadd.f32 %v1272, %v1284
    %v1291 = vadd.f32 %v1273, %v1284
    %v1292 = vadd.f32 %v1274, %v1284
    %v1293 = vadd.f32 %v1275, %v1284
    %v1294 = vadd.f32 %v1286, %v71
    %v1295 = vadd.f32 %v1287, %v72
    %v1296 = vadd.f32 %v1288, %v76
    %v1297 = vadd.f32 %v1289, %v77
    %v1298 = vadd.f32 %v1290, %v73
    %v1299 = vadd.f32 %v1291, %v74
    %v1300 = vadd.f32 %v1292, %v78
    %v1301 = vadd.f32 %v1293, %v79
    %v1302 = vmax.f32 %v1294, 0.0
    %v1303 = vmax.f32 %v1295, 0.0
    %v1304 = vmax.f32 %v1296, 0.0
    %v1305 = vmax.f32 %v1297, 0.0
    %v1306 = vmax.f32 %v1298, 0.0
    %v1307 = vmax.f32 %v1299, 0.0
    %v1308 = vmax.f32 %v1300, 0.0
    %v1309 = vmax.f32 %v1301, 0.0
    %1310 = vst [vmem:[#allocation8] sm:$0xff] %v1302
    %1311 = vst [vmem:[#allocation8 + $0x8] sm:$0xff] %v1303
    %1312 = vst [vmem:[#allocation8 + $0x10] sm:$0xff] %v1306
    %1313 = vst [vmem:[#allocation8 + $0x18] sm:$0xff] %v1307
    %s1314 = scalar_lea.vmem [#allocation8], 32
    %1315 = vst [vmem:[%s1314] sm:$0xff] %v1304
    %1316 = vst [vmem:[%s1314 + $0x8] sm:$0xff] %v1305
    %1317 = vst [vmem:[%s1314 + $0x10] sm:$0xff] %v1308
    %1318 = vst [vmem:[%s1314 + $0x18] sm:$0xff] %v1309
    // Predicated region
    $region46: #{tpu_custom_call.1} parent=1 // pred_check
      _
    $region47: #{tpu_custom_call.1} parent=1 // pred_check_branch
      %1320 = sbr.rel (0) target = $region49
    $region48: #{tpu_custom_call.1} parent=1 // pred_region
      %s1322 = ssub.s32 1024, 1024
      %1323 = vsyncadd [#allocation4], %s1322
      %s1324 = sshll.u32 [#allocation8], 4
      %s1325 = int_to_ptr.vmem [resolvable:$true] %s1324
      %1330 = dma.vmem_to_hbm [thread:$0]  %s1325, 1024, %s8, [#allocation4], 256, 256, 16
    $region49: #{tpu_custom_call.1} parent=1 // pred_fallthru
      _
    // Predicated region
    $region50: #{tpu_custom_call.1} parent=1 // pred_check
      _
    $region51: #{tpu_custom_call.1} parent=1 // pred_check_branch
      %1332 = sbr.rel (0) target = $region53
    $region52: #{tpu_custom_call.1} parent=1 // pred_region
      %1333 = dma.done [#allocation4], 1024
    $region53: #{tpu_custom_call.1} parent=1 // pred_fallthru
      _
    %1334 = vsyncpa [#allocation3], 1
    %1335 = vsyncpa [#allocation6], 1
    %1336 = vsyncpa [#allocation4], 1

</llo_original>
